<compile_context>
chip_gen: v5e
topology: v5e:2x2
jax: 0.10.0
libtpu: 0.0.40
codegen_flags: <defaults>
</compile_context>

<pallas_src>
import functools

import jax
import jax.numpy as jnp
from jax import lax
from jax.experimental import pallas as pl
from jax.experimental.pallas import tpu as pltpu

EPS = 1e-5
LANE = 128                          # channel padding target (lane width)
ROW_TILE = 1024                     # rows per pointwise grid step
MAX_TILE_H = 16                     # output rows per fused expand+dw grid step
VMEM_LIMIT_BYTES = 32 * 1024 * 1024  # safe on v5e/v6e (128 MiB) and v7x (64 MiB)

_MOSAIC_1D = pltpu.CompilerParams(
    dimension_semantics=("parallel",),
    vmem_limit_bytes=VMEM_LIMIT_BYTES,
)
_MOSAIC_2D = pltpu.CompilerParams(
    dimension_semantics=("parallel", "parallel"),
    vmem_limit_bytes=VMEM_LIMIT_BYTES,
)


def _round_up(x, m):
    return (x + m - 1) // m * m


# ---------------------------------------------------------------------------
# Kernel 1: fused expand 1x1 (+BN+ReLU6)  ->  depthwise 3x3 (+BN+ReLU6)
# ---------------------------------------------------------------------------
def _expand_dw_kernel(xb_ref, *rest, stride, h_valid, th_out):
    """One (batch image, output-row strip) per grid step.

    The input window holds the strip plus its 1-input-row halo (delivered by
    the extra single-row BlockSpecs).  The depthwise conv's zero padding is
    applied *after* expansion via a row mask (top/bottom of the image) and via
    pltpu.roll + iota edge masks along W (no misaligned slices / concats).
    """
    if stride == 1:
        xt0_ref, xt1_ref, w1_ref, b1_ref, w2_ref, b2_ref, o_ref = rest
        tails = (xt0_ref, xt1_ref)
        h1s_ref = None
    else:
        xt0_ref, w1_ref, b1_ref, w2_ref, b2_ref, o_ref, h1s_ref = rest
        tails = (xt0_ref,)

    s = pl.program_id(1)
    rb = xb_ref.shape[1]                    # body input rows of the window
    w = xb_ref.shape[2]
    rw = rb + len(tails)                    # total window rows (incl. halo)
    cin = xb_ref.shape[3]
    cexp = w1_ref.shape[1]

    # ---- expand 1x1 on the MXU (BN1 scale folded into w1) + bias + ReLU6 ----
    xw = jnp.concatenate([xb_ref[0]] + [t[0] for t in tails], axis=0)  # (rw,w,cin)
    h1 = jnp.dot(xw.reshape(rw * w, cin), w1_ref[...],
                 preferred_element_type=jnp.float32)
    h1 = jnp.clip(h1 + b1_ref[...], 0.0, 6.0).reshape(rw, w, cexp)

    # window rows that are the depthwise conv's zero padding (image top/bottom)
    # must be zero in the *expanded* domain, not expand(0).
    row = s * rb + lax.broadcasted_iota(jnp.int32, (rw, 1, 1), 0)
    h1 = jnp.where((row >= 1) & (row <= h_valid), h1, 0.0)

    wv = w2_ref[...]                        # (3, 3, cexp) f32, BN2 scale folded
    if stride == 1:
        col = lax.broadcasted_iota(jnp.int32, (1, w, 1), 1)
        left = jnp.where(col >= 1, pltpu.roll(h1, 1, axis=1), 0.0)           # h1[w-1]
        right = jnp.where(col <= w - 2, pltpu.roll(h1, w - 1, axis=1), 0.0)  # h1[w+1]
        taps = (left, h1, right)
        acc = None
        for ky in range(3):
            for kx in range(3):
                term = taps[kx][ky:ky + th_out] * wv[ky, kx]
                acc = term if acc is None else acc + term
        o_ref[0] = jnp.clip(acc + b2_ref[...], 0.0, 6.0).astype(o_ref.dtype)
    else:
        # direct stride-2: strided reads along W, direct row selection along H.
        wo = o_ref.shape[2]
        h1s_ref[...] = h1
        center = h1s_ref[:, pl.ds(0, wo, stride=2), :]    # h1[:, 2*wo,     :]
        right = h1s_ref[:, pl.ds(1, wo, stride=2), :]     # h1[:, 2*wo + 1, :]
        colo = lax.broadcasted_iota(jnp.int32, (1, wo, 1), 1)
        left = jnp.where(colo >= 1, pltpu.roll(right, 1, axis=1), 0.0)  # h1[:, 2*wo-1, :]
        taps = (left, center, right)
        for t in range(th_out):
            acc = None
            for ky in range(3):
                for kx in range(3):
                    term = taps[kx][2 * t + ky] * wv[ky, kx]
                    acc = term if acc is None else acc + term
            o_ref[0, t] = jnp.clip(acc + b2_ref[0], 0.0, 6.0).astype(o_ref.dtype)


def _pick_tile_h(ho, w, c_p, stride):
    """Output rows per strip: divisor of ho, bounded by a per-strip VMEM budget."""
    strip_row_bytes = max(1, w * c_p * 4 * 6)     # ~6 live f32 copies of a row
    budget_rows = max(3, (VMEM_LIMIT_BYTES // 4) // strip_row_bytes)
    max_th = max(1, min(MAX_TILE_H, (budget_rows - 2) // stride))
    for th in range(min(max_th, ho), 0, -1):
        if ho % th == 0:
            return th
    return 1


def expand_depthwise(x_pad, w1, b1, w2, b2, *, stride, h_valid, ho, wo, out_dtype):
    """x_pad: (N, H+2, W, Cin_p), channel-padded, 1 zero row top/bottom.

    Returns h2 = ReLU6(BN2(dw3x3(ReLU6(BN1(conv1x1(x)))))) : (N, ho, wo, C_p).
    """
    n, _, w, cin_p = x_pad.shape
    c_p = w1.shape[1]
    th = _pick_tile_h(ho, w, c_p, stride)
    n_strips = ho // th
    rb = stride * th                    # body input rows per strip
    n_tails = 3 - stride                # extra halo rows below the body
    rw = rb + n_tails

    in_specs = [pl.BlockSpec((1, rb, w, cin_p), lambda b, s: (b, s, 0, 0))]
    args = [x_pad]
    for t in range(n_tails):            # single-row halo blocks (overlap-free specs)
        in_specs.append(
            pl.BlockSpec((1, 1, w, cin_p),
                         lambda b, s, t=t: (b, (s + 1) * rb + t, 0, 0)))
        args.append(x_pad)
    in_specs += [
        pl.BlockSpec((cin_p, c_p), lambda b, s: (0, 0)),
        pl.BlockSpec((1, c_p), lambda b, s: (0, 0)),
        pl.BlockSpec((3, 3, c_p), lambda b, s: (0, 0, 0)),
        pl.BlockSpec((1, c_p), lambda b, s: (0, 0)),
    ]
    args += [w1, b1.reshape(1, c_p).astype(jnp.float32),
             w2, b2.reshape(1, c_p).astype(jnp.float32)]

    scratch = []
    if stride == 2:
        scratch = [pltpu.VMEM((rw, w, c_p), jnp.float32)]

    kernel = functools.partial(_expand_dw_kernel, stride=stride,
                               h_valid=h_valid, th_out=th)
    return pl.pallas_call(
        kernel,
        out_shape=jax.ShapeDtypeStruct((n, ho, wo, c_p), out_dtype),
        grid=(n, n_strips),
        in_specs=in_specs,
        out_specs=pl.BlockSpec((1, th, wo, c_p), lambda b, s: (b, s, 0, 0)),
        scratch_shapes=scratch,
        compiler_params=_MOSAIC_2D,
    )(*args)


# ---------------------------------------------------------------------------
# Kernel 2: project 1x1 (+BN) with fused shortcut conv / identity residual
# ---------------------------------------------------------------------------
def _pw_kernel(x_ref, w_ref, b_ref, o_ref):
    acc = jnp.dot(x_ref[...], w_ref[...], preferred_element_type=jnp.float32)
    o_ref[...] = (acc + b_ref[...]).astype(o_ref.dtype)


def _pw_res_kernel(x_ref, w_ref, b_ref, res_ref, o_ref):
    acc = jnp.dot(x_ref[...], w_ref[...], preferred_element_type=jnp.float32)
    acc = acc + b_ref[...] + res_ref[...].astype(jnp.float32)
    o_ref[...] = acc.astype(o_ref.dtype)


def _pw_sc_kernel(x_ref, w_ref, b_ref, xin_ref, wsc_ref, bsc_ref, o_ref):
    acc = jnp.dot(x_ref[...], w_ref[...], preferred_element_type=jnp.float32)
    acc = acc + b_ref[...]
    acc = acc + jnp.dot(xin_ref[...], wsc_ref[...],
                        preferred_element_type=jnp.float32) + bsc_ref[...]
    o_ref[...] = acc.astype(o_ref.dtype)


def pointwise(x2d, w, bias, *, out_dtype, residual=None, shortcut=None):
    """(M, K) @ (K, N) 1x1 conv; BN scale folded into `w`, kernel adds bias.

    residual: identity shortcut (M, N), added in-kernel.
    shortcut: (xin, wsc, bsc) -> shortcut 1x1 conv + BN fused in-kernel.
    """
    assert residual is None or shortcut is None
    m, k = x2d.shape
    nc = w.shape[1]

    tm = min(ROW_TILE, _round_up(m, 8))
    if m > 8 and pl.cdiv(m, tm) < 2:        # >= 2 parallel grid steps (v7x)
        tm = _round_up(pl.cdiv(m, 2), 8)

    in_specs = [
        pl.BlockSpec((tm, k), lambda i: (i, 0)),
        pl.BlockSpec((k, nc), lambda i: (0, 0)),
        pl.BlockSpec((1, nc), lambda i: (0, 0)),
    ]
    args = [x2d, w, bias.reshape(1, nc).astype(jnp.float32)]

    if shortcut is not None:
        xin, wsc, bsc = shortcut
        kin = xin.shape[1]
        kernel = _pw_sc_kernel
        in_specs += [
            pl.BlockSpec((tm, kin), lambda i: (i, 0)),
            pl.BlockSpec((kin, nc), lambda i: (0, 0)),
            pl.BlockSpec((1, nc), lambda i: (0, 0)),
        ]
        args += [xin, wsc, bsc.reshape(1, nc).astype(jnp.float32)]
    elif residual is not None:
        kernel = _pw_res_kernel
        in_specs.append(pl.BlockSpec((tm, nc), lambda i: (i, 0)))
        args.append(residual)
    else:
        kernel = _pw_kernel

    return pl.pallas_call(
        kernel,
        out_shape=jax.ShapeDtypeStruct((m, nc), out_dtype),
        grid=(pl.cdiv(m, tm),),
        in_specs=in_specs,
        out_specs=pl.BlockSpec((tm, nc), lambda i: (i, 0)),
        compiler_params=_MOSAIC_1D,
    )(*args)


# ---------------------------------------------------------------------------
# Block (parameters + forward)
# ---------------------------------------------------------------------------
def _fold_bn(bn):
    s = bn["gamma"] / jnp.sqrt(bn["var"] + EPS)
    b = bn["beta"] - bn["mean"] * s
    return s, b


def _pad_mat(w2d, rows, cols):
    return jnp.pad(w2d, ((0, rows - w2d.shape[0]), (0, cols - w2d.shape[1])))


def _pad_vec(v, n):
    return jnp.pad(v, (0, n - v.shape[0]))


def init_block_params(key, in_channels, out_channels, expansion, stride):
    channels = expansion * in_channels
    ks = jax.random.split(key, 8)

    def bn_params(k, c):
        k1, k2, k3, k4 = jax.random.split(k, 4)
        return dict(
            gamma=jax.random.uniform(k1, (c,), jnp.float32, 0.5, 1.5),
            beta=0.1 * jax.random.normal(k2, (c,), jnp.float32),
            mean=0.1 * jax.random.normal(k3, (c,), jnp.float32),
            var=jax.random.uniform(k4, (c,), jnp.float32, 0.5, 1.5),
        )

    p = dict(
        w1=0.1 * jax.random.normal(ks[0], (channels, in_channels, 1, 1), jnp.float32),
        bn1=bn_params(ks[1], channels),
        w2=0.1 * jax.random.normal(ks[2], (channels, 1, 3, 3), jnp.float32),
        bn2=bn_params(ks[3], channels),
        w3=0.1 * jax.random.normal(ks[4], (out_channels, channels, 1, 1), jnp.float32),
        bn3=bn_params(ks[5], out_channels),
    )
    if stride == 1 and in_channels != out_channels:
        p["w_sc"] = 0.1 * jax.random.normal(
            ks[6], (out_channels, in_channels, 1, 1), jnp.float32)
        p["bn_sc"] = bn_params(ks[7], out_channels)
    return p


def block_forward(params, x_nchw, *, in_channels, out_channels, expansion,
                  stride, compute_dtype=jnp.bfloat16, out_dtype=jnp.float32):
    channels = expansion * in_channels
    cin_p = _round_up(in_channels, LANE)
    c_p = _round_up(channels, LANE)
    cout_p = _round_up(out_channels, LANE)

    # NCHW -> NHWC once at the block edge; pad channels to a lane multiple and
    # H by one zero row each side (depthwise halo source).  Padded channels
    # stay exactly zero end-to-end.
    # TODO(synk): keep the whole network NHWC with 128-padded channels so this
    # relayout amortizes to a single pair at the network edges.
    x = jnp.transpose(x_nchw, (0, 2, 3, 1))
    n, h, w, _ = x.shape
    if stride == 2:
        assert w % 2 == 0, "stride-2 path assumes even W"  # TODO(synk): odd-W edge tap
    x_pad = jnp.pad(x, ((0, 0), (1, 1), (0, 0), (0, cin_p - in_channels)))
    x_pad = x_pad.astype(compute_dtype)

    # fold BN scales into the conv weights; kernels only add the bias
    s1, b1 = _fold_bn(params["bn1"])
    s2, b2 = _fold_bn(params["bn2"])
    s3, b3 = _fold_bn(params["bn3"])
    w1 = _pad_mat(params["w1"][:, :, 0, 0].T * s1[None, :], cin_p, c_p)
    w1 = w1.astype(compute_dtype)
    w2 = jnp.transpose(params["w2"][:, 0], (1, 2, 0)) * s2[None, None, :]  # (3,3,C)
    w2 = jnp.pad(w2, ((0, 0), (0, 0), (0, c_p - channels))).astype(jnp.float32)
    w3 = _pad_mat(params["w3"][:, :, 0, 0].T * s3[None, :], c_p, cout_p)
    w3 = w3.astype(compute_dtype)

    ho = (h - 1) // stride + 1
    wo = (w - 1) // stride + 1

    # fused: expand 1x1 + bn1 + relu6 + depthwise 3x3 + bn2 + relu6
    h2 = expand_depthwise(x_pad, w1, _pad_vec(b1, c_p), w2, _pad_vec(b2, c_p),
                          stride=stride, h_valid=h, ho=ho, wo=wo,
                          out_dtype=compute_dtype)
    h2_2d = h2.reshape(n * ho * wo, c_p)

    # project 1x1 + bn3 (+ fused shortcut conv / identity residual)
    b3p = _pad_vec(b3, cout_p)
    if stride == 1:
        x2d = x_pad[:, 1:h + 1].reshape(n * h * w, cin_p)
        if in_channels != out_channels:
            ssc, bsc = _fold_bn(params["bn_sc"])
            wsc = _pad_mat(params["w_sc"][:, :, 0, 0].T * ssc[None, :],
                           cin_p, cout_p).astype(compute_dtype)
            out2d = pointwise(h2_2d, w3, b3p, out_dtype=out_dtype,
                              shortcut=(x2d, wsc, _pad_vec(bsc, cout_p)))
        else:
            out2d = pointwise(h2_2d, w3, b3p, out_dtype=out_dtype, residual=x2d)
    else:
        out2d = pointwise(h2_2d, w3, b3p, out_dtype=out_dtype)

    out = out2d.reshape(n, ho, wo, cout_p)[..., :out_channels]
    return jnp.transpose(out, (0, 3, 1, 2))                 # NHWC -> NCHW


# ---------------------------------------------------------------------------
# Pure-JAX reference (for correctness check)
# ---------------------------------------------------------------------------
def block_forward_ref(params, x, *, in_channels, out_channels, expansion, stride):
    def bn(y, p):
        s = p["gamma"] / jnp.sqrt(p["var"] + EPS)
        b = p["beta"] - p["mean"] * s
        return y * s[None, :, None, None] + b[None, :, None, None]

    def conv(y, w, st=1, groups=1, pad=0):
        return lax.conv_general_dilated(
            y, w, (st, st), [(pad, pad), (pad, pad)],
            feature_group_count=groups,
            dimension_numbers=("NCHW", "OIHW", "NCHW"))

    relu6 = lambda y: jnp.clip(y, 0.0, 6.0)
    channels = expansion * in_channels
    out = relu6(bn(conv(x, params["w1"]), params["bn1"]))
    out = relu6(bn(conv(out, params["w2"], st=stride, groups=channels, pad=1),
                   params["bn2"]))
    out = bn(conv(out, params["w3"]), params["bn3"])
    if stride == 1:
        if in_channels != out_channels:
            sc = bn(conv(x, params["w_sc"]), params["bn_sc"])
        else:
            sc = x
        out = out + sc
    return out


# ---------------------------------------------------------------------------
if __name__ == "__main__":
    key = jax.random.PRNGKey(0)
    configs = [
        dict(in_channels=4, out_channels=8, expansion=6, stride=1),   # fused conv shortcut
        dict(in_channels=8, out_channels=8, expansion=6, stride=1),   # identity shortcut
        dict(in_channels=4, out_channels=8, expansion=6, stride=2),   # no residual
    ]
    for i, cfg in enumerate(configs):
        kx, kp = jax.random.split(jax.random.fold_in(key, i))
        x = jax.random.normal(kx, (2, cfg["in_channels"], 16, 16), jnp.float32)
        params = init_block_params(kp, **cfg)
        ref = block_forward_ref(params, x, **cfg)

        for dtype, rtol, atol in ((jnp.float32, 1e-4, 1e-4),
                                  (jnp.bfloat16, 5e-2, 5e-2)):
            out = block_forward(params, x, compute_dtype=dtype, **cfg)
            out = jax.block_until_ready(out)
            assert out.shape == ref.shape, (out.shape, ref.shape)
            err = float(jnp.max(jnp.abs(out - ref)))
            assert jnp.allclose(out, ref, rtol=rtol, atol=atol), (cfg, str(dtype), err)
    print("KERNEL_OK")
</pallas_src>

<mosaic_0001>
module attributes {stable_mosaic.version = 11 : i64} {
  func.func @_expand_dw_kernel(%arg0: i32, %arg1: i32, %arg2: memref<1x16x16x128xf32, #tpu.memory_space<vmem>>, %arg3: memref<1x1x16x128xf32, #tpu.memory_space<vmem>>, %arg4: memref<1x1x16x128xf32, #tpu.memory_space<vmem>>, %arg5: memref<128x128xf32, #tpu.memory_space<vmem>>, %arg6: memref<1x128xf32, #tpu.memory_space<vmem>>, %arg7: memref<3x3x128xf32, #tpu.memory_space<vmem>>, %arg8: memref<1x128xf32, #tpu.memory_space<vmem>>, %arg9: memref<1x16x16x128xf32, #tpu.memory_space<vmem>>) attributes {dimension_semantics = [#tpu.dimension_semantics<parallel>, #tpu.dimension_semantics<parallel>], iteration_bounds = array<i64: 2, 1>, scalar_prefetch = 0 : i64, scratch_operands = 0 : i64, tpu.core_type = #tpu.core_type<tc>, window_params = [{transform_indices = @transform_0, window_bounds = array<i64: 1, 16, 16, 128>}, {transform_indices = @transform_1, window_bounds = array<i64: 1, 1, 16, 128>}, {transform_indices = @transform_2, window_bounds = array<i64: 1, 1, 16, 128>}, {pipeline_mode = #tpu.pipeline_mode<synchronous>, transform_indices = @transform_3, window_bounds = array<i64: 128, 128>}, {pipeline_mode = #tpu.pipeline_mode<synchronous>, transform_indices = @transform_4, window_bounds = array<i64: 1, 128>}, {pipeline_mode = #tpu.pipeline_mode<synchronous>, transform_indices = @transform_5, window_bounds = array<i64: 3, 3, 128>}, {pipeline_mode = #tpu.pipeline_mode<synchronous>, transform_indices = @transform_6, window_bounds = array<i64: 1, 128>}, {transform_indices = @transform_7, window_bounds = array<i64: 1, 16, 16, 128>}]} {
    %c0 = arith.constant 0 : index
    %c0_0 = arith.constant 0 : index
    %c0_1 = arith.constant 0 : index
    %c0_2 = arith.constant 0 : index
    %0 = vector.load %arg2[%c0, %c0_0, %c0_1, %c0_2] : memref<1x16x16x128xf32, #tpu.memory_space<vmem>>, vector<1x16x16x128xf32>
    %1 = vector.shape_cast %0 : vector<1x16x16x128xf32> to vector<16x16x128xf32>
    %c0_3 = arith.constant 0 : index
    %c0_4 = arith.constant 0 : index
    %c0_5 = arith.constant 0 : index
    %c0_6 = arith.constant 0 : index
    %2 = vector.load %arg3[%c0_3, %c0_4, %c0_5, %c0_6] : memref<1x1x16x128xf32, #tpu.memory_space<vmem>>, vector<1x1x16x128xf32>
    %3 = vector.shape_cast %2 : vector<1x1x16x128xf32> to vector<1x16x128xf32>
    %c0_7 = arith.constant 0 : index
    %c0_8 = arith.constant 0 : index
    %c0_9 = arith.constant 0 : index
    %c0_10 = arith.constant 0 : index
    %4 = vector.load %arg4[%c0_7, %c0_8, %c0_9, %c0_10] : memref<1x1x16x128xf32, #tpu.memory_space<vmem>>, vector<1x1x16x128xf32>
    %5 = vector.shape_cast %4 : vector<1x1x16x128xf32> to vector<1x16x128xf32>
    %6 = tpu.concatenate %1, %3, %5 in 0 : vector<16x16x128xf32>, vector<1x16x128xf32>, vector<1x16x128xf32> -> vector<18x16x128xf32>
    %7 = vector.shape_cast %6 : vector<18x16x128xf32> to vector<288x128xf32>
    %c0_11 = arith.constant 0 : index
    %c0_12 = arith.constant 0 : index
    %8 = vector.load %arg5[%c0_11, %c0_12] : memref<128x128xf32, #tpu.memory_space<vmem>>, vector<128x128xf32>
    %cst = arith.constant dense<0.000000e+00> : vector<288x128xf32>
    %9 = tpu.matmul %7, %8, %cst {dimension_numbers = #tpu.dot_dimension_numbers<[1], [0], [0], [1], [0, 0, 1, 1], [], []>} : vector<288x128xf32>, vector<128x128xf32>, vector<288x128xf32> -> vector<288x128xf32>
    %c0_13 = arith.constant 0 : index
    %c0_14 = arith.constant 0 : index
    %10 = vector.load %arg6[%c0_13, %c0_14] : memref<1x128xf32, #tpu.memory_space<vmem>>, vector<1x128xf32>
    %11 = vector.broadcast %10 : vector<1x128xf32> to vector<288x128xf32>
    %12 = arith.addf %9, %11 : vector<288x128xf32>
    %cst_15 = arith.constant 0.000000e+00 : f32
    %cst_16 = arith.constant 6.000000e+00 : f32
    %13 = vector.broadcast %cst_15 : f32 to vector<288x128xf32>
    %14 = arith.maximumf %13, %12 : vector<288x128xf32>
    %15 = vector.broadcast %cst_16 : f32 to vector<288x128xf32>
    %16 = arith.minimumf %15, %14 : vector<288x128xf32>
    %17 = vector.shape_cast %16 : vector<288x128xf32> to vector<18x16x128xf32>
    %c16_i32 = arith.constant 16 : i32
    %18 = arith.muli %arg1, %c16_i32 : i32
    %19 = tpu.iota {dimensions = array<i32: 0>} : vector<18x1x1xi32>
    %20 = vector.broadcast %18 : i32 to vector<18x1x1xi32>
    %21 = arith.addi %20, %19 : vector<18x1x1xi32>
    %c1_i32 = arith.constant 1 : i32
    %22 = vector.broadcast %c1_i32 : i32 to vector<18x1x1xi32>
    %23 = arith.cmpi sge, %21, %22 : vector<18x1x1xi32>
    %c16_i32_17 = arith.constant 16 : i32
    %24 = vector.broadcast %c16_i32_17 : i32 to vector<18x1x1xi32>
    %25 = arith.cmpi sle, %21, %24 : vector<18x1x1xi32>
    %26 = arith.andi %23, %25 : vector<18x1x1xi1>
    %cst_18 = arith.constant 0.000000e+00 : f32
    %27 = vector.shape_cast %26 : vector<18x1x1xi1> to vector<18x1x1xi1>
    %28 = vector.broadcast %27 : vector<18x1x1xi1> to vector<18x16x128xi1>
    %29 = vector.broadcast %cst_18 : f32 to vector<18x16x128xf32>
    %30 = arith.select %28, %17, %29 : vector<18x16x128xi1>, vector<18x16x128xf32>
    %c0_19 = arith.constant 0 : index
    %c0_20 = arith.constant 0 : index
    %c0_21 = arith.constant 0 : index
    %31 = vector.load %arg7[%c0_19, %c0_20, %c0_21] : memref<3x3x128xf32, #tpu.memory_space<vmem>>, vector<3x3x128xf32>
    %32 = tpu.iota {dimensions = array<i32: 1>} : vector<1x16x1xi32>
    %c1_i32_22 = arith.constant 1 : i32
    %33 = vector.broadcast %c1_i32_22 : i32 to vector<1x16x1xi32>
    %34 = arith.cmpi sge, %32, %33 : vector<1x16x1xi32>
    %c1_i32_23 = arith.constant 1 : i32
    %35 = tpu.dynamic_rotate %30 by %c1_i32_23 dim 1 : vector<18x16x128xf32>, i32 -> vector<18x16x128xf32>
    %cst_24 = arith.constant 0.000000e+00 : f32
    %36 = vector.shape_cast %34 : vector<1x16x1xi1> to vector<1x16x1xi1>
    %37 = vector.broadcast %36 : vector<1x16x1xi1> to vector<18x16x128xi1>
    %38 = vector.broadcast %cst_24 : f32 to vector<18x16x128xf32>
    %39 = arith.select %37, %35, %38 : vector<18x16x128xi1>, vector<18x16x128xf32>
    %c14_i32 = arith.constant 14 : i32
    %40 = vector.broadcast %c14_i32 : i32 to vector<1x16x1xi32>
    %41 = arith.cmpi sle, %32, %40 : vector<1x16x1xi32>
    %c15_i32 = arith.constant 15 : i32
    %42 = tpu.dynamic_rotate %30 by %c15_i32 dim 1 : vector<18x16x128xf32>, i32 -> vector<18x16x128xf32>
    %cst_25 = arith.constant 0.000000e+00 : f32
    %43 = vector.shape_cast %41 : vector<1x16x1xi1> to vector<1x16x1xi1>
    %44 = vector.broadcast %43 : vector<1x16x1xi1> to vector<18x16x128xi1>
    %45 = vector.broadcast %cst_25 : f32 to vector<18x16x128xf32>
    %46 = arith.select %44, %42, %45 : vector<18x16x128xi1>, vector<18x16x128xf32>
    %47 = vector.extract_strided_slice %39 {offsets = [0, 0, 0], sizes = [16, 16, 128], strides = [1, 1, 1]} : vector<18x16x128xf32> to vector<16x16x128xf32>
    %48 = vector.extract_strided_slice %31 {offsets = [0, 0, 0], sizes = [1, 1, 128], strides = [1, 1, 1]} : vector<3x3x128xf32> to vector<1x1x128xf32>
    %49 = vector.shape_cast %48 : vector<1x1x128xf32> to vector<128xf32>
    %50 = vector.shape_cast %49 : vector<128xf32> to vector<1x1x128xf32>
    %51 = vector.broadcast %50 : vector<1x1x128xf32> to vector<16x16x128xf32>
    %52 = arith.mulf %47, %51 : vector<16x16x128xf32>
    %53 = vector.extract_strided_slice %30 {offsets = [0, 0, 0], sizes = [16, 16, 128], strides = [1, 1, 1]} : vector<18x16x128xf32> to vector<16x16x128xf32>
    %54 = vector.extract_strided_slice %31 {offsets = [0, 1, 0], sizes = [1, 1, 128], strides = [1, 1, 1]} : vector<3x3x128xf32> to vector<1x1x128xf32>
    %55 = vector.shape_cast %54 : vector<1x1x128xf32> to vector<128xf32>
    %56 = vector.shape_cast %55 : vector<128xf32> to vector<1x1x128xf32>
    %57 = vector.broadcast %56 : vector<1x1x128xf32> to vector<16x16x128xf32>
    %58 = arith.mulf %53, %57 : vector<16x16x128xf32>
    %59 = arith.addf %52, %58 : vector<16x16x128xf32>
    %60 = vector.extract_strided_slice %46 {offsets = [0, 0, 0], sizes = [16, 16, 128], strides = [1, 1, 1]} : vector<18x16x128xf32> to vector<16x16x128xf32>
    %61 = vector.extract_strided_slice %31 {offsets = [0, 2, 0], sizes = [1, 1, 128], strides = [1, 1, 1]} : vector<3x3x128xf32> to vector<1x1x128xf32>
    %62 = vector.shape_cast %61 : vector<1x1x128xf32> to vector<128xf32>
    %63 = vector.shape_cast %62 : vector<128xf32> to vector<1x1x128xf32>
    %64 = vector.broadcast %63 : vector<1x1x128xf32> to vector<16x16x128xf32>
    %65 = arith.mulf %60, %64 : vector<16x16x128xf32>
    %66 = arith.addf %59, %65 : vector<16x16x128xf32>
    %67 = vector.extract_strided_slice %39 {offsets = [1, 0, 0], sizes = [16, 16, 128], strides = [1, 1, 1]} : vector<18x16x128xf32> to vector<16x16x128xf32>
    %68 = vector.extract_strided_slice %31 {offsets = [1, 0, 0], sizes = [1, 1, 128], strides = [1, 1, 1]} : vector<3x3x128xf32> to vector<1x1x128xf32>
    %69 = vector.shape_cast %68 : vector<1x1x128xf32> to vector<128xf32>
    %70 = vector.shape_cast %69 : vector<128xf32> to vector<1x1x128xf32>
    %71 = vector.broadcast %70 : vector<1x1x128xf32> to vector<16x16x128xf32>
    %72 = arith.mulf %67, %71 : vector<16x16x128xf32>
    %73 = arith.addf %66, %72 : vector<16x16x128xf32>
    %74 = vector.extract_strided_slice %30 {offsets = [1, 0, 0], sizes = [16, 16, 128], strides = [1, 1, 1]} : vector<18x16x128xf32> to vector<16x16x128xf32>
    %75 = vector.extract_strided_slice %31 {offsets = [1, 1, 0], sizes = [1, 1, 128], strides = [1, 1, 1]} : vector<3x3x128xf32> to vector<1x1x128xf32>
    %76 = vector.shape_cast %75 : vector<1x1x128xf32> to vector<128xf32>
    %77 = vector.shape_cast %76 : vector<128xf32> to vector<1x1x128xf32>
    %78 = vector.broadcast %77 : vector<1x1x128xf32> to vector<16x16x128xf32>
    %79 = arith.mulf %74, %78 : vector<16x16x128xf32>
    %80 = arith.addf %73, %79 : vector<16x16x128xf32>
    %81 = vector.extract_strided_slice %46 {offsets = [1, 0, 0], sizes = [16, 16, 128], strides = [1, 1, 1]} : vector<18x16x128xf32> to vector<16x16x128xf32>
    %82 = vector.extract_strided_slice %31 {offsets = [1, 2, 0], sizes = [1, 1, 128], strides = [1, 1, 1]} : vector<3x3x128xf32> to vector<1x1x128xf32>
    %83 = vector.shape_cast %82 : vector<1x1x128xf32> to vector<128xf32>
    %84 = vector.shape_cast %83 : vector<128xf32> to vector<1x1x128xf32>
    %85 = vector.broadcast %84 : vector<1x1x128xf32> to vector<16x16x128xf32>
    %86 = arith.mulf %81, %85 : vector<16x16x128xf32>
    %87 = arith.addf %80, %86 : vector<16x16x128xf32>
    %88 = vector.extract_strided_slice %39 {offsets = [2, 0, 0], sizes = [16, 16, 128], strides = [1, 1, 1]} : vector<18x16x128xf32> to vector<16x16x128xf32>
    %89 = vector.extract_strided_slice %31 {offsets = [2, 0, 0], sizes = [1, 1, 128], strides = [1, 1, 1]} : vector<3x3x128xf32> to vector<1x1x128xf32>
    %90 = vector.shape_cast %89 : vector<1x1x128xf32> to vector<128xf32>
    %91 = vector.shape_cast %90 : vector<128xf32> to vector<1x1x128xf32>
    %92 = vector.broadcast %91 : vector<1x1x128xf32> to vector<16x16x128xf32>
    %93 = arith.mulf %88, %92 : vector<16x16x128xf32>
    %94 = arith.addf %87, %93 : vector<16x16x128xf32>
    %95 = vector.extract_strided_slice %30 {offsets = [2, 0, 0], sizes = [16, 16, 128], strides = [1, 1, 1]} : vector<18x16x128xf32> to vector<16x16x128xf32>
    %96 = vector.extract_strided_slice %31 {offsets = [2, 1, 0], sizes = [1, 1, 128], strides = [1, 1, 1]} : vector<3x3x128xf32> to vector<1x1x128xf32>
    %97 = vector.shape_cast %96 : vector<1x1x128xf32> to vector<128xf32>
    %98 = vector.shape_cast %97 : vector<128xf32> to vector<1x1x128xf32>
    %99 = vector.broadcast %98 : vector<1x1x128xf32> to vector<16x16x128xf32>
    %100 = arith.mulf %95, %99 : vector<16x16x128xf32>
    %101 = arith.addf %94, %100 : vector<16x16x128xf32>
    %102 = vector.extract_strided_slice %46 {offsets = [2, 0, 0], sizes = [16, 16, 128], strides = [1, 1, 1]} : vector<18x16x128xf32> to vector<16x16x128xf32>
    %103 = vector.extract_strided_slice %31 {offsets = [2, 2, 0], sizes = [1, 1, 128], strides = [1, 1, 1]} : vector<3x3x128xf32> to vector<1x1x128xf32>
    %104 = vector.shape_cast %103 : vector<1x1x128xf32> to vector<128xf32>
    %105 = vector.shape_cast %104 : vector<128xf32> to vector<1x1x128xf32>
    %106 = vector.broadcast %105 : vector<1x1x128xf32> to vector<16x16x128xf32>
    %107 = arith.mulf %102, %106 : vector<16x16x128xf32>
    %108 = arith.addf %101, %107 : vector<16x16x128xf32>
    %c0_26 = arith.constant 0 : index
    %c0_27 = arith.constant 0 : index
    %109 = vector.load %arg8[%c0_26, %c0_27] : memref<1x128xf32, #tpu.memory_space<vmem>>, vector<1x128xf32>
    %110 = vector.shape_cast %109 : vector<1x128xf32> to vector<1x1x128xf32>
    %111 = vector.broadcast %110 : vector<1x1x128xf32> to vector<16x16x128xf32>
    %112 = arith.addf %108, %111 : vector<16x16x128xf32>
    %cst_28 = arith.constant 0.000000e+00 : f32
    %cst_29 = arith.constant 6.000000e+00 : f32
    %113 = vector.broadcast %cst_28 : f32 to vector<16x16x128xf32>
    %114 = arith.maximumf %113, %112 : vector<16x16x128xf32>
    %115 = vector.broadcast %cst_29 : f32 to vector<16x16x128xf32>
    %116 = arith.minimumf %115, %114 : vector<16x16x128xf32>
    %c0_30 = arith.constant 0 : index
    %c0_31 = arith.constant 0 : index
    %c0_32 = arith.constant 0 : index
    %c0_33 = arith.constant 0 : index
    %117 = vector.load %arg9[%c0_30, %c0_31, %c0_32, %c0_33] : memref<1x16x16x128xf32, #tpu.memory_space<vmem>>, vector<1x16x16x128xf32>
    %118 = vector.shape_cast %117 : vector<1x16x16x128xf32> to vector<16x16x128xf32>
    %119 = vector.shape_cast %116 : vector<16x16x128xf32> to vector<1x16x16x128xf32>
    tpu.vector_store %arg9[%c0_30, %c0_31, %c0_32, %c0_33], %119 {strides = array<i32>} : memref<1x16x16x128xf32, #tpu.memory_space<vmem>>, vector<1x16x16x128xf32>,
    return
  }
  func.func @transform_0(%arg0: i32, %arg1: i32) -> (i32, i32, i32, i32) {
    %c0_i32 = arith.constant 0 : i32
    %c0_i32_0 = arith.constant 0 : i32
    %c0_i32_1 = arith.constant 0 : i32
    return %arg0, %arg1, %c0_i32, %c0_i32_0 : i32, i32, i32, i32
  }
  func.func @transform_1(%arg0: i32, %arg1: i32) -> (i32, i32, i32, i32) {
    %c1_i32 = arith.constant 1 : i32
    %0 = arith.addi %arg1, %c1_i32 : i32
    %c16_i32 = arith.constant 16 : i32
    %1 = arith.muli %0, %c16_i32 : i32
    %c0_i32 = arith.constant 0 : i32
    %2 = arith.addi %1, %c0_i32 : i32
    %c0_i32_0 = arith.constant 0 : i32
    %c0_i32_1 = arith.constant 0 : i32
    %c0_i32_2 = arith.constant 0 : i32
    return %arg0, %2, %c0_i32_0, %c0_i32_1 : i32, i32, i32, i32
  }
  func.func @transform_2(%arg0: i32, %arg1: i32) -> (i32, i32, i32, i32) {
    %c1_i32 = arith.constant 1 : i32
    %0 = arith.addi %arg1, %c1_i32 : i32
    %c16_i32 = arith.constant 16 : i32
    %1 = arith.muli %0, %c16_i32 : i32
    %c1_i32_0 = arith.constant 1 : i32
    %2 = arith.addi %1, %c1_i32_0 : i32
    %c0_i32 = arith.constant 0 : i32
    %c0_i32_1 = arith.constant 0 : i32
    %c0_i32_2 = arith.constant 0 : i32
    return %arg0, %2, %c0_i32, %c0_i32_1 : i32, i32, i32, i32
  }
  func.func @transform_3(%arg0: i32, %arg1: i32) -> (i32, i32) {
    %c0_i32 = arith.constant 0 : i32
    %c0_i32_0 = arith.constant 0 : i32
    %c0_i32_1 = arith.constant 0 : i32
    return %c0_i32, %c0_i32_0 : i32, i32
  }
  func.func @transform_4(%arg0: i32, %arg1: i32) -> (i32, i32) {
    %c0_i32 = arith.constant 0 : i32
    %c0_i32_0 = arith.constant 0 : i32
    %c0_i32_1 = arith.constant 0 : i32
    return %c0_i32, %c0_i32_0 : i32, i32
  }
  func.func @transform_5(%arg0: i32, %arg1: i32) -> (i32, i32, i32) {
    %c0_i32 = arith.constant 0 : i32
    %c0_i32_0 = arith.constant 0 : i32
    %c0_i32_1 = arith.constant 0 : i32
    %c0_i32_2 = arith.constant 0 : i32
    return %c0_i32, %c0_i32_0, %c0_i32_1 : i32, i32, i32
  }
  func.func @transform_6(%arg0: i32, %arg1: i32) -> (i32, i32) {
    %c0_i32 = arith.constant 0 : i32
    %c0_i32_0 = arith.constant 0 : i32
    %c0_i32_1 = arith.constant 0 : i32
    return %c0_i32, %c0_i32_0 : i32, i32
  }
  func.func @transform_7(%arg0: i32, %arg1: i32) -> (i32, i32, i32, i32) {
    %c0_i32 = arith.constant 0 : i32
    %c0_i32_0 = arith.constant 0 : i32
    %c0_i32_1 = arith.constant 0 : i32
    return %arg0, %arg1, %c0_i32, %c0_i32_0 : i32, i32, i32, i32
  }
}

</mosaic_0001>

<llo_original>
// kernel: tpu_custom_call.1
$region0: #{tpu_custom_call.1}
  #allocation0 [shape = 'u32[]', space=smem, size = 0x4, offset = 0x4, fixed_abs, tag = 'smem constant byte address 0x4 - core index']
  #allocation1 [shape = 'u32[72,128]{1,0:T(1,128)}', space=vmem, size = 0x9000, scoped, tag = 'internal scratch']
  %s0 = inlined_call_operand.hbm [shape: f32[2,18,16,128], index: 0, kind: input, shape index: {}]
  %s1 = inlined_call_operand.hbm [shape: f32[2,18,16,128], index: 1, kind: input, shape index: {}]
  %s2 = inlined_call_operand.hbm [shape: f32[2,18,16,128], index: 2, kind: input, shape index: {}]
  %s3 = inlined_call_operand.hbm [shape: f32[128,128], index: 3, kind: input, shape index: {}]
  %s4 = inlined_call_operand.vmem [shape: f32[1,128], index: 4, kind: input, shape index: {}]
  %s5 = inlined_call_operand.hbm [shape: f32[3,3,128], index: 5, kind: input, shape index: {}]
  %s6 = inlined_call_operand.vmem [shape: f32[1,128], index: 6, kind: input, shape index: {}]
  %s7 = inlined_call_operand.hbm [shape: f32[2,16,16,128], index: 7, kind: output, shape index: {}]
  %s8 = sld [smem:[#allocation0]]
  $region81: #{tpu_custom_call.1} parent=0
    _
  %s10 = ssub.s32 1, %s8
  %s11 = scalar_select 0, %s10, %s8
  $region1: #{tpu_custom_call.1} parent=0
    #allocation2 [shape = 'u8[262144]{0}', space=vmem, size = 0x40000, scoped, tag = 'input window, operand 0']
    #allocation3 [shape = 's32[2]{0}', space=sflag, size = 0x8, scoped, tag = 'scoped memory for tpu_custom_call.1']
    #allocation4 [shape = 's32[2]{0}', space=sflag, size = 0x8, scoped, tag = 'scoped memory for tpu_custom_call.1']
    #allocation5 [shape = 'u8[16384]{0}', space=vmem, size = 0x4000, scoped, tag = 'input window, operand 1']
    #allocation6 [shape = 's32[2]{0}', space=sflag, size = 0x8, scoped, tag = 'scoped memory for tpu_custom_call.1']
    #allocation7 [shape = 'u8[16384]{0}', space=vmem, size = 0x4000, scoped, tag = 'input window, operand 2']
    #allocation8 [shape = 'u8[65536]{0}', space=vmem, size = 0x10000, scoped, tag = 'input window, operand 3, single buffered']
    #allocation9 [shape = 's32[1]{0}', space=sflag, size = 0x4, scoped, tag = 'scoped memory for tpu_custom_call.1']
    #allocation10 [shape = 'u8[6144]{0}', space=vmem, size = 0x1800, scoped, tag = 'input window, operand 5, single buffered']
    #allocation11 [shape = 'u8[262144]{0}', space=vmem, size = 0x40000, scoped, tag = 'output window, operand 0']
    %12 = vsyncpa [#allocation3], 0
    %s13 = scalar_lea.sflag [#allocation3], 1
    %14 = vsyncpa %s13, 0
    %15 = vsyncpa [#allocation6], 0
    %s16 = scalar_lea.sflag [#allocation6], 1
    %17 = vsyncpa %s16, 0
    %18 = vsyncpa [#allocation9], 0
    %19 = vsyncpa [#allocation4], 0
    %s20 = scalar_lea.sflag [#allocation4], 1
    %21 = vsyncpa %s20, 0
    loop: start=0, step=1, limit=4
    $region2: #{tpu_custom_call.1} parent=1 // loop_pre_header
      _
    $region3: #{tpu_custom_call.1} parent=1 // loop_header
      %s23 = sphi 0, %s27
      %p24 = scmp.ge.s32.totalorder %s23, 4
      %s30 = sphi 0, %s42
      %s31 = sphi 0, %s38
      %s32 = sphi 0, %s30
      %s33 = sphi 0, %s31
      %s34 = sphi 0, %s32
      %s35 = sphi 0, %s33
      %s47 = sphi 0, %s49
      %s50 = sphi 0, %s47
      %s51 = sphi 0, %s50
      %s67 = sphi 0, %s51
      %s79 = sphi 0, %s81
      %s82 = sphi 0, %s79
      %s83 = sphi 0, %s82
      %s99 = sphi 0, %s83
      %s113 = sphi 0, %s115
      %s116 = sphi 0, %s113
      %s117 = sphi 0, %s116
      %s133 = sphi 0, %s117
      %s137 = sphi 0, %s137
      %s139 = sphi 0, %s137
      %s140 = sphi 0, %s139
      %s154 = sphi 0, %s140
      %s158 = sphi 0, %s158
      %s160 = sphi 0, %s158
      %s161 = sphi 0, %s160
      %s175 = sphi 0, %s161
      %s179 = sphi 0, %s179
      %s181 = sphi 0, %s179
      %s182 = sphi 0, %s181
      %s196 = sphi 0, %s182
      %s200 = sphi 0, %s200
      %s202 = sphi 0, %s200
      %s203 = sphi 0, %s202
      %s217 = sphi 0, %s203
      %s225 = sphi 0, %s227
      %s228 = sphi 0, %s225
      %s229 = sphi 0, %s228
      %s245 = sphi 0, %s229
    $region4: #{tpu_custom_call.1} parent=1 // loop_header_branch
      %26 = sbr.rel (%p24) target = $region8
    $region5: #{tpu_custom_call.1} parent=1 // loop_body
      %s28 = ssub.s32 %s23, 1
      %s29 = ssub.s32 %s23, 2
      %s36 = sadd.s32 1, %s31
      %p37 = scmp.ge.s32.totalorder %s36, 1
      %s38 = scalar_select %p37, 0, %s36
      %s39 = sadd.s32 1, %s30
      %s40 = scalar_select %p37, %s39, %s30
      %p41 = scmp.ge.s32.totalorder %s40, 2
      %s42 = scalar_select %p41, 0, %s40
      %s43 = ssub.s32 %s30, %s42
      %s44 = ssub.s32 %s31, %s38
      %s45 = sor.u32 %s43, %s44
      %p46 = scmp.eq.s32.totalorder %s45, 0
      %s48 = sadd.s32 %s47, 1
      %s49 = scalar_select %p46, %s47, %s48
      %p52 = pneg %p46
      %p53 = scmp.eq.s32.totalorder %s23, 1
      %p54 = por %p52, %p53
      %p55 = scmp.ne.s32.totalorder %s47, %s50
      %p56 = scmp.eq.s32.totalorder %s23, 0
      %p57 = por %p55, %p56
      %p58 = scmp.ne.s32.totalorder %s47, %s50
      %p59 = scmp.eq.s32.totalorder %s28, 1
      %p60 = por %p58, %p59
      %p61 = scmp.ne.s32.totalorder %s50, %s51
      %p62 = scmp.eq.s32.totalorder %s28, 0
      %p63 = por %p61, %p62
      %p64 = scmp.ne.s32.totalorder %s50, %s51
      %p65 = scmp.eq.s32.totalorder %s29, 1
      %p66 = por %p64, %p65
      %p68 = scmp.ne.s32.totalorder %s51, %s67
      %p69 = scmp.eq.s32.totalorder %s29, 0
      %p70 = por %p68, %p69
      %s71 = sadd.s32 %s31, 1
      %s72 = smul.u32 %s71, 16
      %s73 = sadd.s32 %s38, 1
      %s74 = smul.u32 %s73, 16
      %s75 = ssub.s32 %s30, %s42
      %s76 = ssub.s32 %s72, %s74
      %s77 = sor.u32 %s75, %s76
      %p78 = scmp.eq.s32.totalorder %s77, 0
      %s80 = sadd.s32 %s79, 1
      %s81 = scalar_select %p78, %s79, %s80
      %p84 = pneg %p78
      %p85 = scmp.eq.s32.totalorder %s23, 1
      %p86 = por %p84, %p85
      %p87 = scmp.ne.s32.totalorder %s79, %s82
      %p88 = scmp.eq.s32.totalorder %s23, 0
      %p89 = por %p87, %p88
      %p90 = scmp.ne.s32.totalorder %s79, %s82
      %p91 = scmp.eq.s32.totalorder %s28, 1
      %p92 = por %p90, %p91
      %p93 = scmp.ne.s32.totalorder %s82, %s83
      %p94 = scmp.eq.s32.totalorder %s28, 0
      %p95 = por %p93, %p94
      %p96 = scmp.ne.s32.totalorder %s82, %s83
      %p97 = scmp.eq.s32.totalorder %s29, 1
      %p98 = por %p96, %p97
      %p100 = scmp.ne.s32.totalorder %s83, %s99
      %p101 = scmp.eq.s32.totalorder %s29, 0
      %p102 = por %p100, %p101
      %s103 = sadd.s32 %s31, 1
      %s104 = smul.u32 %s103, 16
      %s105 = sadd.s32 %s104, 1
      %s106 = sadd.s32 %s38, 1
      %s107 = smul.u32 %s106, 16
      %s108 = sadd.s32 %s107, 1
      %s109 = ssub.s32 %s30, %s42
      %s110 = ssub.s32 %s105, %s108
      %s111 = sor.u32 %s109, %s110
      %p112 = scmp.eq.s32.totalorder %s111, 0
      %s114 = sadd.s32 %s113, 1
      %s115 = scalar_select %p112, %s113, %s114
      %p118 = pneg %p112
      %p119 = scmp.eq.s32.totalorder %s23, 1
      %p120 = por %p118, %p119
      %p121 = scmp.ne.s32.totalorder %s113, %s116
      %p122 = scmp.eq.s32.totalorder %s23, 0
      %p123 = por %p121, %p122
      %p124 = scmp.ne.s32.totalorder %s113, %s116
      %p125 = scmp.eq.s32.totalorder %s28, 1
      %p126 = por %p124, %p125
      %p127 = scmp.ne.s32.totalorder %s116, %s117
      %p128 = scmp.eq.s32.totalorder %s28, 0
      %p129 = por %p127, %p128
      %p130 = scmp.ne.s32.totalorder %s116, %s117
      %p131 = scmp.eq.s32.totalorder %s29, 1
      %p132 = por %p130, %p131
      %p134 = scmp.ne.s32.totalorder %s117, %s133
      %p135 = scmp.eq.s32.totalorder %s29, 0
      %p136 = por %p134, %p135
      %s138 = sadd.s32 %s137, 1
      %p141 = scmp.eq.s32.totalorder %s23, 1
      %p142 = scmp.ne.s32.totalorder %s137, %s139
      %p143 = scmp.eq.s32.totalorder %s23, 0
      %p144 = por %p142, %p143
      %p145 = scmp.ne.s32.totalorder %s137, %s139
      %p146 = scmp.eq.s32.totalorder %s28, 1
      %p147 = por %p145, %p146
      %p148 = scmp.ne.s32.totalorder %s139, %s140
      %p149 = scmp.eq.s32.totalorder %s28, 0
      %p150 = por %p148, %p149
      %p151 = scmp.ne.s32.totalorder %s139, %s140
      %p152 = scmp.eq.s32.totalorder %s29, 1
      %p153 = por %p151, %p152
      %p155 = scmp.ne.s32.totalorder %s140, %s154
      %p156 = scmp.eq.s32.totalorder %s29, 0
      %p157 = por %p155, %p156
      %s159 = sadd.s32 %s158, 1
      %p162 = scmp.eq.s32.totalorder %s23, 1
      %p163 = scmp.ne.s32.totalorder %s158, %s160
      %p164 = scmp.eq.s32.totalorder %s23, 0
      %p165 = por %p163, %p164
      %p166 = scmp.ne.s32.totalorder %s158, %s160
      %p167 = scmp.eq.s32.totalorder %s28, 1
      %p168 = por %p166, %p167
      %p169 = scmp.ne.s32.totalorder %s160, %s161
      %p170 = scmp.eq.s32.totalorder %s28, 0
      %p171 = por %p169, %p170
      %p172 = scmp.ne.s32.totalorder %s160, %s161
      %p173 = scmp.eq.s32.totalorder %s29, 1
      %p174 = por %p172, %p173
      %p176 = scmp.ne.s32.totalorder %s161, %s175
      %p177 = scmp.eq.s32.totalorder %s29, 0
      %p178 = por %p176, %p177
      %s180 = sadd.s32 %s179, 1
      %p183 = scmp.eq.s32.totalorder %s23, 1
      %p184 = scmp.ne.s32.totalorder %s179, %s181
      %p185 = scmp.eq.s32.totalorder %s23, 0
      %p186 = por %p184, %p185
      %p187 = scmp.ne.s32.totalorder %s179, %s181
      %p188 = scmp.eq.s32.totalorder %s28, 1
      %p189 = por %p187, %p188
      %p190 = scmp.ne.s32.totalorder %s181, %s182
      %p191 = scmp.eq.s32.totalorder %s28, 0
      %p192 = por %p190, %p191
      %p193 = scmp.ne.s32.totalorder %s181, %s182
      %p194 = scmp.eq.s32.totalorder %s29, 1
      %p195 = por %p193, %p194
      %p197 = scmp.ne.s32.totalorder %s182, %s196
      %p198 = scmp.eq.s32.totalorder %s29, 0
      %p199 = por %p197, %p198
      %s201 = sadd.s32 %s200, 1
      %p204 = scmp.eq.s32.totalorder %s23, 1
      %p205 = scmp.ne.s32.totalorder %s200, %s202
      %p206 = scmp.eq.s32.totalorder %s23, 0
      %p207 = por %p205, %p206
      %p208 = scmp.ne.s32.totalorder %s200, %s202
      %p209 = scmp.eq.s32.totalorder %s28, 1
      %p210 = por %p208, %p209
      %p211 = scmp.ne.s32.totalorder %s202, %s203
      %p212 = scmp.eq.s32.totalorder %s28, 0
      %p213 = por %p211, %p212
      %p214 = scmp.ne.s32.totalorder %s202, %s203
      %p215 = scmp.eq.s32.totalorder %s29, 1
      %p216 = por %p214, %p215
      %p218 = scmp.ne.s32.totalorder %s203, %s217
      %p219 = scmp.eq.s32.totalorder %s29, 0
      %p220 = por %p218, %p219
      %s221 = ssub.s32 %s30, %s42
      %s222 = ssub.s32 %s31, %s38
      %s223 = sor.u32 %s221, %s222
      %p224 = scmp.eq.s32.totalorder %s223, 0
      %s226 = sadd.s32 %s225, 1
      %s227 = scalar_select %p224, %s225, %s226
      %p230 = pneg %p224
      %p231 = scmp.eq.s32.totalorder %s23, 1
      %p232 = por %p230, %p231
      %p233 = scmp.ne.s32.totalorder %s225, %s228
      %p234 = scmp.eq.s32.totalorder %s23, 0
      %p235 = por %p233, %p234
      %p236 = scmp.ne.s32.totalorder %s225, %s228
      %p237 = scmp.eq.s32.totalorder %s28, 1
      %p238 = por %p236, %p237
      %p239 = scmp.ne.s32.totalorder %s228, %s229
      %p240 = scmp.eq.s32.totalorder %s28, 0
      %p241 = por %p239, %p240
      %p242 = scmp.ne.s32.totalorder %s228, %s229
      %p243 = scmp.eq.s32.totalorder %s29, 1
      %p244 = por %p242, %p243
      %p246 = scmp.ne.s32.totalorder %s229, %s245
      %p247 = scmp.eq.s32.totalorder %s29, 0
      %p248 = por %p246, %p247
      %p249 = scmp.le.s32.totalorder 1, %s23
      %p250 = scmp.lt.s32.totalorder %s23, 3
      %p251 = pnand %p249, %p250
      %p252 = pneg %p251
      // Predicated region
      $region9: #{tpu_custom_call.1} parent=5 // pred_check
        _
      $region10: #{tpu_custom_call.1} parent=5 // pred_check_branch
        %254 = sbr.rel (%p251) target = $region12
      $region11: #{tpu_custom_call.1} parent=5 // pred_region
        %s255 = ssub.s32 %s23, 1
        // Predicated region
        $region13: #{tpu_custom_call.1} parent=11 // pred_check
          %p256 = pneg %p150
        $region14: #{tpu_custom_call.1} parent=11 // pred_check_branch
          %258 = sbr.rel (%p256) target = $region16
        $region15: #{tpu_custom_call.1} parent=11 // pred_region
          %260 = vsyncadd [#allocation9], 0
          %s261 = sshll.u32 %s3, 4
          %s262 = int_to_ptr.hbm [resolvable:$true] %s261
          %s263 = sshll.u32 [#allocation8], 4
          %s264 = int_to_ptr.vmem [resolvable:$true] %s263
          %269 = dma.hbm_to_vmem [thread:$0]  %s262, 2048, %s264, [#allocation9], 128, 128, 8
        $region16: #{tpu_custom_call.1} parent=11 // pred_fallthru
          _
        // Predicated region
        $region17: #{tpu_custom_call.1} parent=11 // pred_check
          %p270 = pneg %p171
        $region18: #{tpu_custom_call.1} parent=11 // pred_check_branch
          %272 = sbr.rel (%p270) target = $region20
        $region19: #{tpu_custom_call.1} parent=11 // pred_region
          _
        $region20: #{tpu_custom_call.1} parent=11 // pred_fallthru
          _
        // Predicated region
        $region21: #{tpu_custom_call.1} parent=11 // pred_check
          %p273 = pneg %p192
        $region22: #{tpu_custom_call.1} parent=11 // pred_check_branch
          %275 = sbr.rel (%p273) target = $region24
        $region23: #{tpu_custom_call.1} parent=11 // pred_region
          %277 = vsyncadd [#allocation9], 0
          %s278 = sshll.u32 %s5, 4
          %s279 = int_to_ptr.hbm [resolvable:$true] %s278
          %s280 = sshll.u32 [#allocation10], 4
          %s281 = int_to_ptr.vmem [resolvable:$true] %s280
          %286 = dma.hbm_to_vmem [thread:$0]  %s279, 192, %s281, [#allocation9], 64, 64, 4
        $region24: #{tpu_custom_call.1} parent=11 // pred_fallthru
          _
        // Predicated region
        $region25: #{tpu_custom_call.1} parent=11 // pred_check
          %p287 = pneg %p213
        $region26: #{tpu_custom_call.1} parent=11 // pred_check_branch
          %289 = sbr.rel (%p287) target = $region28
        $region27: #{tpu_custom_call.1} parent=11 // pred_region
          _
        $region28: #{tpu_custom_call.1} parent=11 // pred_fallthru
          _
      $region12: #{tpu_custom_call.1} parent=5 // pred_fallthru
        _
      %p290 = scmp.lt.s32.totalorder %s23, 2
      // Predicated region
      $region29: #{tpu_custom_call.1} parent=5 // pred_check
        %p291 = pneg %p290
      $region30: #{tpu_custom_call.1} parent=5 // pred_check_branch
        %293 = sbr.rel (%p291) target = $region32
      $region31: #{tpu_custom_call.1} parent=5 // pred_region
        // Predicated region
        $region33: #{tpu_custom_call.1} parent=31 // pred_check
          %p294 = pneg %p57
        $region34: #{tpu_custom_call.1} parent=31 // pred_check_branch
          %296 = sbr.rel (%p294) target = $region36
        $region35: #{tpu_custom_call.1} parent=31 // pred_region
          %s297 = sand.u32 %s47, 1
          %s298 = scalar_lea.sflag [#allocation3], %s297
          %s299 = sand.u32 %s47, 1
          %s300 = smul.addr %s299, 256
          %s301 = scalar_lea.vmem [#allocation2], %s300
          %s302 = smul.u32 16, %s31
          %s303 = ssub.s32 18, %s302
          %p304 = scmp.lt.s32.totalorder %s303, 16
          %s305 = scalar_select %p304, %s303, 16
          %s306 = smul.u32 8, %s305
          %s307 = smul.u32 %s306, 2
          %s308 = ssub.s32 256, %s307
          %s309 = sshll.u32 %s308, 4
          %310 = vsyncadd %s298, %s309
          %p311 = scmp.ne.s32.totalorder 0, %s307
          %s312 = smul.addr %s302, 2
          %s313 = smul.addr %s30, 36
          %s314 = sadd.s32 %s312, %s313
          %s315 = smul.addr %s314, 8
          %s316 = scalar_lea.hbm %s0, %s315
          %s317 = smul.u32 %s305, 2
          %s318 = smul.u32 8, %s317
          %s319 = sshll.u32 %s316, 4
          %s320 = int_to_ptr.hbm [resolvable:$true] %s319
          %s321 = sshll.u32 %s301, 4
          %s322 = int_to_ptr.vmem [resolvable:$true] %s321
          %s323 = sshll.u32 %s318, 4
          %327 = dma.hbm_to_vmem [thread:$0]  (%p311), %s320, %s323, %s322, %s298, 128, 128, 8
        $region36: #{tpu_custom_call.1} parent=31 // pred_fallthru
          _
        // Predicated region
        $region37: #{tpu_custom_call.1} parent=31 // pred_check
          %p328 = pneg %p89
        $region38: #{tpu_custom_call.1} parent=31 // pred_check_branch
          %330 = sbr.rel (%p328) target = $region40
        $region39: #{tpu_custom_call.1} parent=31 // pred_region
          %s331 = sand.u32 %s23, 1
          %s332 = scalar_lea.sflag [#allocation6], %s331
          %s333 = sand.u32 %s79, 1
          %s334 = smul.addr %s333, 16
          %s335 = scalar_lea.vmem [#allocation5], %s334
          %s336 = sadd.s32 %s31, 1
          %s337 = smul.u32 %s336, 16
          %339 = vsyncadd %s332, 0
          %s340 = smul.addr %s337, 2
          %s341 = smul.addr %s30, 36
          %s342 = sadd.s32 %s340, %s341
          %s343 = smul.addr %s342, 8
          %s344 = scalar_lea.hbm %s1, %s343
          %s345 = sshll.u32 %s344, 4
          %s346 = int_to_ptr.hbm [resolvable:$true] %s345
          %s347 = sshll.u32 %s335, 4
          %s348 = int_to_ptr.vmem [resolvable:$true] %s347
          %353 = dma.hbm_to_vmem [thread:$0]  %s346, 256, %s348, %s332, 128, 128, 8
        $region40: #{tpu_custom_call.1} parent=31 // pred_fallthru
          _
        // Predicated region
        $region41: #{tpu_custom_call.1} parent=31 // pred_check
          %p354 = pneg %p123
        $region42: #{tpu_custom_call.1} parent=31 // pred_check_branch
          %356 = sbr.rel (%p354) target = $region44
        $region43: #{tpu_custom_call.1} parent=31 // pred_region
          %s357 = sand.u32 %s23, 1
          %s358 = scalar_lea.sflag [#allocation6], %s357
          %s359 = sand.u32 %s113, 1
          %s360 = smul.addr %s359, 16
          %s361 = scalar_lea.vmem [#allocation7], %s360
          %s362 = sadd.s32 %s31, 1
          %s363 = smul.u32 %s362, 16
          %s364 = sadd.s32 %s363, 1
          %366 = vsyncadd %s358, 0
          %s367 = smul.addr %s364, 2
          %s368 = smul.addr %s30, 36
          %s369 = sadd.s32 %s367, %s368
          %s370 = smul.addr %s369, 8
          %s371 = scalar_lea.hbm %s2, %s370
          %s372 = sshll.u32 %s371, 4
          %s373 = int_to_ptr.hbm [resolvable:$true] %s372
          %s374 = sshll.u32 %s361, 4
          %s375 = int_to_ptr.vmem [resolvable:$true] %s374
          %380 = dma.hbm_to_vmem [thread:$0]  %s373, 256, %s375, %s358, 128, 128, 8
        $region44: #{tpu_custom_call.1} parent=31 // pred_fallthru
          _
      $region32: #{tpu_custom_call.1} parent=5 // pred_fallthru
        _
      %p381 = scmp.le.s32.totalorder 1, %s23
      %p382 = scmp.lt.s32.totalorder %s23, 3
      %p383 = pnand %p381, %p382
      %p384 = pneg %p383
      // Predicated region
      $region45: #{tpu_custom_call.1} parent=5 // pred_check
        _
      $region46: #{tpu_custom_call.1} parent=5 // pred_check_branch
        %386 = sbr.rel (%p383) target = $region48
      $region47: #{tpu_custom_call.1} parent=5 // pred_region
        %s387 = ssub.s32 %s23, 1
        %s388 = sand.u32 %s50, 1
        %s389 = scalar_lea.sflag [#allocation3], %s388
        %s390 = sand.u32 %s50, 1
        %s391 = smul.addr %s390, 256
        %s392 = scalar_lea.vmem [#allocation2], %s391
        // Predicated region
        $region49: #{tpu_custom_call.1} parent=47 // pred_check
          %p393 = pneg %p63
        $region50: #{tpu_custom_call.1} parent=47 // pred_check_branch
          %395 = sbr.rel (%p393) target = $region52
        $region51: #{tpu_custom_call.1} parent=47 // pred_region
          %397 = dma.done %s389, 4096
        $region52: #{tpu_custom_call.1} parent=47 // pred_fallthru
          _
        %s398 = sand.u32 %s28, 1
        %s399 = scalar_lea.sflag [#allocation6], %s398
        %s400 = sand.u32 %s82, 1
        %s401 = smul.addr %s400, 16
        %s402 = scalar_lea.vmem [#allocation5], %s401
        // Predicated region
        $region53: #{tpu_custom_call.1} parent=47 // pred_check
          %p403 = pneg %p95
        $region54: #{tpu_custom_call.1} parent=47 // pred_check_branch
          %405 = sbr.rel (%p403) target = $region56
        $region55: #{tpu_custom_call.1} parent=47 // pred_region
          %407 = dma.done %s399, 256
        $region56: #{tpu_custom_call.1} parent=47 // pred_fallthru
          _
        %s408 = sand.u32 %s28, 1
        %s409 = scalar_lea.sflag [#allocation6], %s408
        %s410 = sand.u32 %s116, 1
        %s411 = smul.addr %s410, 16
        %s412 = scalar_lea.vmem [#allocation7], %s411
        // Predicated region
        $region57: #{tpu_custom_call.1} parent=47 // pred_check
          %p413 = pneg %p129
        $region58: #{tpu_custom_call.1} parent=47 // pred_check_branch
          %415 = sbr.rel (%p413) target = $region60
        $region59: #{tpu_custom_call.1} parent=47 // pred_region
          %417 = dma.done %s409, 256
        $region60: #{tpu_custom_call.1} parent=47 // pred_fallthru
          _
        // Predicated region
        $region61: #{tpu_custom_call.1} parent=47 // pred_check
          %p418 = pneg %p150
        $region62: #{tpu_custom_call.1} parent=47 // pred_check_branch
          %420 = sbr.rel (%p418) target = $region64
        $region63: #{tpu_custom_call.1} parent=47 // pred_region
          %422 = dma.done [#allocation9], 2048
        $region64: #{tpu_custom_call.1} parent=47 // pred_fallthru
          _
        // Predicated region
        $region65: #{tpu_custom_call.1} parent=47 // pred_check
          %p423 = pneg %p192
        $region66: #{tpu_custom_call.1} parent=47 // pred_check_branch
          %425 = sbr.rel (%p423) target = $region68
        $region67: #{tpu_custom_call.1} parent=47 // pred_region
          %427 = dma.done [#allocation9], 192
        $region68: #{tpu_custom_call.1} parent=47 // pred_fallthru
          _
        %s428 = sand.u32 %s50, 1
        %s429 = scalar_lea.sflag [#allocation3], %s428
        %s430 = sand.u32 %s50, 1
        %s431 = smul.addr %s430, 256
        %s432 = scalar_lea.vmem [#allocation2], %s431
        %p433 = pneg %p63
        %p434 = pneg %p60
        %s435 = sand.u32 %s28, 1
        %s436 = scalar_lea.sflag [#allocation6], %s435
        %s437 = sand.u32 %s82, 1
        %s438 = smul.addr %s437, 16
        %s439 = scalar_lea.vmem [#allocation5], %s438
        %p440 = pneg %p95
        %p441 = pneg %p92
        %s442 = sand.u32 %s28, 1
        %s443 = scalar_lea.sflag [#allocation6], %s442
        %s444 = sand.u32 %s116, 1
        %s445 = smul.addr %s444, 16
        %s446 = scalar_lea.vmem [#allocation7], %s445
        %p447 = pneg %p129
        %p448 = pneg %p126
        %p449 = pneg %p150
        %p450 = pneg %p147
        %p451 = pneg %p171
        %p452 = pneg %p168
        %p453 = pneg %p192
        %p454 = pneg %p189
        %p455 = pneg %p213
        %p456 = pneg %p210
        %p457 = pneg %p241
        %p458 = pneg %p238
        %s459 = sand.u32 %s228, 1
        %s460 = scalar_lea.sflag [#allocation4], %s459
        %s461 = sand.u32 %s228, 1
        %s462 = smul.addr %s461, 256
        %s463 = scalar_lea.vmem [#allocation11], %s462
        %s464 = smul.u32 16, %s33
        %s465 = ssub.s32 18, %s464
        %p466 = scmp.lt.s32.totalorder %s465, 16
        %s467 = scalar_select %p466, %s465, 16
        %s468 = smul.u32 8, %s467
        %s469 = smul.u32 %s468, 2
        %s470 = sadd.s32 %s33, 1
        %s471 = smul.u32 %s470, 16
        %s472 = sadd.s32 %s33, 1
        %s473 = smul.u32 %s472, 16
        %s474 = sadd.s32 %s473, 1
        %s475 = smul.u32 16, %s33
        %v476 = vld [vmem:[%s392] sm:$0xff]
        %v477 = vld [vmem:[%s392 + $0x8] sm:$0xff]
        %v478 = vld [vmem:[%s392 + $0x10] sm:$0xff]
        %v479 = vld [vmem:[%s392 + $0x18] sm:$0xff]
        %v480 = vld [vmem:[%s392 + $0x20] sm:$0xff]
        %v481 = vld [vmem:[%s392 + $0x28] sm:$0xff]
        %v482 = vld [vmem:[%s392 + $0x30] sm:$0xff]
        %v483 = vld [vmem:[%s392 + $0x38] sm:$0xff]
        %v484 = vld [vmem:[%s392 + $0x40] sm:$0xff]
        %v485 = vld [vmem:[%s392 + $0x48] sm:$0xff]
        %v486 = vld [vmem:[%s392 + $0x50] sm:$0xff]
        %v487 = vld [vmem:[%s392 + $0x58] sm:$0xff]
        %v488 = vld [vmem:[%s392 + $0x60] sm:$0xff]
        %v489 = vld [vmem:[%s392 + $0x68] sm:$0xff]
        %v490 = vld [vmem:[%s392 + $0x70] sm:$0xff]
        %v491 = vld [vmem:[%s392 + $0x78] sm:$0xff]
        %v492 = vld [vmem:[%s392 + $0x80] sm:$0xff]
        %v493 = vld [vmem:[%s392 + $0x88] sm:$0xff]
        %v494 = vld [vmem:[%s392 + $0x90] sm:$0xff]
        %v495 = vld [vmem:[%s392 + $0x98] sm:$0xff]
        %v496 = vld [vmem:[%s392 + $0xa0] sm:$0xff]
        %v497 = vld [vmem:[%s392 + $0xa8] sm:$0xff]
        %v498 = vld [vmem:[%s392 + $0xb0] sm:$0xff]
        %v499 = vld [vmem:[%s392 + $0xb8] sm:$0xff]
        %v500 = vld [vmem:[%s392 + $0xc0] sm:$0xff]
        %v501 = vld [vmem:[%s392 + $0xc8] sm:$0xff]
        %v502 = vld [vmem:[%s392 + $0xd0] sm:$0xff]
        %v503 = vld [vmem:[%s392 + $0xd8] sm:$0xff]
        %v504 = vld [vmem:[%s392 + $0xe0] sm:$0xff]
        %v505 = vld [vmem:[%s392 + $0xe8] sm:$0xff]
        %v506 = vld [vmem:[%s392 + $0xf0] sm:$0xff]
        %v507 = vld [vmem:[%s392 + $0xf8] sm:$0xff]
        %v508 = vld [vmem:[%s402] sm:$0xff]
        %v509 = vld [vmem:[%s402 + $0x8] sm:$0xff]
        %v510 = vld [vmem:[%s412] sm:$0xff]
        %v511 = vld [vmem:[%s412 + $0x8] sm:$0xff]
        %v512 = vld [vmem:[#allocation8] sm:$0xff]
        %v513 = vld [vmem:[#allocation8 + $0x8] sm:$0xff]
        %v514 = vld [vmem:[#allocation8 + $0x10] sm:$0xff]
        %v515 = vld [vmem:[#allocation8 + $0x18] sm:$0xff]
        %v516 = vld [vmem:[#allocation8 + $0x20] sm:$0xff]
        %v517 = vld [vmem:[#allocation8 + $0x28] sm:$0xff]
        %v518 = vld [vmem:[#allocation8 + $0x30] sm:$0xff]
        %v519 = vld [vmem:[#allocation8 + $0x38] sm:$0xff]
        %v520 = vld [vmem:[#allocation8 + $0x40] sm:$0xff]
        %v521 = vld [vmem:[#allocation8 + $0x48] sm:$0xff]
        %v522 = vld [vmem:[#allocation8 + $0x50] sm:$0xff]
        %v523 = vld [vmem:[#allocation8 + $0x58] sm:$0xff]
        %v524 = vld [vmem:[#allocation8 + $0x60] sm:$0xff]
        %v525 = vld [vmem:[#allocation8 + $0x68] sm:$0xff]
        %v526 = vld [vmem:[#allocation8 + $0x70] sm:$0xff]
        %v527 = vld [vmem:[#allocation8 + $0x78] sm:$0xff]
        %v528 = vld [vmem:[%s4] sm:$0x1]
        %v530 = vperm.slane %v528, 0
        %532 = vmatpush.msra.mxu0 %v527
        %533 = vmatpush.msra.mxu0 %v526
        %534 = vmatpush.msra.mxu0 %v525
        %535 = vmatpush.msra.mxu0 %v524
        %536 = vmatpush.msra.mxu0 %v523
        %537 = vmatpush.msra.mxu0 %v522
        %538 = vmatpush.msra.mxu0 %v521
        %539 = vmatpush.msra.mxu0 %v520
        %540 = vmatpush.msra.mxu0 %v519
        %541 = vmatpush.msra.mxu0 %v518
        %542 = vmatpush.msra.mxu0 %v517
        %543 = vmatpush.msra.mxu0 %v516
        %544 = vmatpush.msra.mxu0 %v515
        %545 = vmatpush.msra.mxu0 %v514
        %546 = vmatpush.msra.mxu0 %v513
        %547 = vmatpush.msra.mxu0 %v512
        %548 = vmatmul.f32.gmra.mxu0 %v476
        %v549 = vpop.f32.mrf.mxu0
        %v550 = vadd.f32 %v530, %v549
        %551 = vmatmul.f32.gmra.mxu0 %v477
        %v552 = vpop.f32.mrf.mxu0
        %v553 = vadd.f32 %v530, %v552
        %554 = vmatmul.f32.gmra.mxu0 %v478
        %v555 = vpop.f32.mrf.mxu0
        %v556 = vadd.f32 %v530, %v555
        %557 = vmatmul.f32.gmra.mxu0 %v479
        %v558 = vpop.f32.mrf.mxu0
        %v559 = vadd.f32 %v530, %v558
        %560 = vmatmul.f32.gmra.mxu0 %v480
        %v561 = vpop.f32.mrf.mxu0
        %v562 = vadd.f32 %v530, %v561
        %563 = vmatmul.f32.gmra.mxu0 %v481
        %v564 = vpop.f32.mrf.mxu0
        %v565 = vadd.f32 %v530, %v564
        %566 = vmatmul.f32.gmra.mxu0 %v482
        %v567 = vpop.f32.mrf.mxu0
        %v568 = vadd.f32 %v530, %v567
        %569 = vmatmul.f32.gmra.mxu0 %v483
        %v570 = vpop.f32.mrf.mxu0
        %v571 = vadd.f32 %v530, %v570
        %572 = vmatmul.f32.gmra.mxu0 %v484
        %v573 = vpop.f32.mrf.mxu0
        %v574 = vadd.f32 %v530, %v573
        %575 = vmatmul.f32.gmra.mxu0 %v485
        %v576 = vpop.f32.mrf.mxu0
        %v577 = vadd.f32 %v530, %v576
        %578 = vmatmul.f32.gmra.mxu0 %v486
        %v579 = vpop.f32.mrf.mxu0
        %v580 = vadd.f32 %v530, %v579
        %581 = vmatmul.f32.gmra.mxu0 %v487
        %v582 = vpop.f32.mrf.mxu0
        %v583 = vadd.f32 %v530, %v582
        %584 = vmatmul.f32.gmra.mxu0 %v488
        %v585 = vpop.f32.mrf.mxu0
        %v586 = vadd.f32 %v530, %v585
        %587 = vmatmul.f32.gmra.mxu0 %v489
        %v588 = vpop.f32.mrf.mxu0
        %v589 = vadd.f32 %v530, %v588
        %590 = vmatmul.f32.gmra.mxu0 %v490
        %v591 = vpop.f32.mrf.mxu0
        %v592 = vadd.f32 %v530, %v591
        %593 = vmatmul.f32.gmra.mxu0 %v491
        %v594 = vpop.f32.mrf.mxu0
        %v595 = vadd.f32 %v530, %v594
        %596 = vmatmul.f32.gmra.mxu0 %v492
        %v597 = vpop.f32.mrf.mxu0
        %v598 = vadd.f32 %v530, %v597
        %599 = vmatmul.f32.gmra.mxu0 %v493
        %v600 = vpop.f32.mrf.mxu0
        %v601 = vadd.f32 %v530, %v600
        %602 = vmatmul.f32.gmra.mxu0 %v494
        %v603 = vpop.f32.mrf.mxu0
        %v604 = vadd.f32 %v530, %v603
        %605 = vmatmul.f32.gmra.mxu0 %v495
        %v606 = vpop.f32.mrf.mxu0
        %v607 = vadd.f32 %v530, %v606
        %608 = vmatmul.f32.gmra.mxu0 %v496
        %v609 = vpop.f32.mrf.mxu0
        %v610 = vadd.f32 %v530, %v609
        %611 = vmatmul.f32.gmra.mxu0 %v497
        %v612 = vpop.f32.mrf.mxu0
        %v613 = vadd.f32 %v530, %v612
        %614 = vmatmul.f32.gmra.mxu0 %v498
        %v615 = vpop.f32.mrf.mxu0
        %v616 = vadd.f32 %v530, %v615
        %617 = vmatmul.f32.gmra.mxu0 %v499
        %v618 = vpop.f32.mrf.mxu0
        %v619 = vadd.f32 %v530, %v618
        %620 = vmatmul.f32.gmra.mxu0 %v500
        %v621 = vpop.f32.mrf.mxu0
        %v622 = vadd.f32 %v530, %v621
        %623 = vmatmul.f32.gmra.mxu0 %v501
        %v624 = vpop.f32.mrf.mxu0
        %v625 = vadd.f32 %v530, %v624
        %626 = vmatmul.f32.gmra.mxu0 %v502
        %v627 = vpop.f32.mrf.mxu0
        %v628 = vadd.f32 %v530, %v627
        %629 = vmatmul.f32.gmra.mxu0 %v503
        %v630 = vpop.f32.mrf.mxu0
        %v631 = vadd.f32 %v530, %v630
        %632 = vmatmul.f32.gmra.mxu0 %v504
        %v633 = vpop.f32.mrf.mxu0
        %v634 = vadd.f32 %v530, %v633
        %635 = vmatmul.f32.gmra.mxu0 %v505
        %v636 = vpop.f32.mrf.mxu0
        %v637 = vadd.f32 %v530, %v636
        %638 = vmatmul.f32.gmra.mxu0 %v506
        %v639 = vpop.f32.mrf.mxu0
        %v640 = vadd.f32 %v530, %v639
        %641 = vmatmul.f32.gmra.mxu0 %v507
        %v642 = vpop.f32.mrf.mxu0
        %v643 = vadd.f32 %v530, %v642
        %644 = vmatmul.f32.gmra.mxu0 %v508
        %v645 = vpop.f32.mrf.mxu0
        %v646 = vadd.f32 %v530, %v645
        %647 = vmatmul.f32.gmra.mxu0 %v509
        %v648 = vpop.f32.mrf.mxu0
        %v649 = vadd.f32 %v530, %v648
        %650 = vmatmul.f32.gmra.mxu0 %v510
        %v651 = vpop.f32.mrf.mxu0
        %v652 = vadd.f32 %v530, %v651
        %653 = vmatmul.f32.gmra.mxu0 %v511
        %v654 = vpop.f32.mrf.mxu0
        %v655 = vadd.f32 %v530, %v654
        %656 = vdwg.mxu0
        %v657 = vmax.f32 %v550, 0.0
        %v658 = vmax.f32 %v553, 0.0
        %v659 = vmax.f32 %v556, 0.0
        %v660 = vmax.f32 %v559, 0.0
        %v661 = vmax.f32 %v562, 0.0
        %v662 = vmax.f32 %v565, 0.0
        %v663 = vmax.f32 %v568, 0.0
        %v664 = vmax.f32 %v571, 0.0
        %v665 = vmax.f32 %v574, 0.0
        %v666 = vmax.f32 %v577, 0.0
        %v667 = vmax.f32 %v580, 0.0
        %v668 = vmax.f32 %v583, 0.0
        %v669 = vmax.f32 %v586, 0.0
        %v670 = vmax.f32 %v589, 0.0
        %v671 = vmax.f32 %v592, 0.0
        %v672 = vmax.f32 %v595, 0.0
        %v673 = vmax.f32 %v598, 0.0
        %v674 = vmax.f32 %v601, 0.0
        %v675 = vmax.f32 %v604, 0.0
        %v676 = vmax.f32 %v607, 0.0
        %v677 = vmax.f32 %v610, 0.0
        %v678 = vmax.f32 %v613, 0.0
        %v679 = vmax.f32 %v616, 0.0
        %v680 = vmax.f32 %v619, 0.0
        %v681 = vmax.f32 %v622, 0.0
        %v682 = vmax.f32 %v625, 0.0
        %v683 = vmax.f32 %v628, 0.0
        %v684 = vmax.f32 %v631, 0.0
        %v685 = vmax.f32 %v634, 0.0
        %v686 = vmax.f32 %v637, 0.0
        %v687 = vmax.f32 %v640, 0.0
        %v688 = vmax.f32 %v643, 0.0
        %v689 = vmax.f32 %v646, 0.0
        %v690 = vmax.f32 %v649, 0.0
        %v691 = vmax.f32 %v652, 0.0
        %v692 = vmax.f32 %v655, 0.0
        %v693 = vmin.f32 %v657, 6.0
        %v694 = vmin.f32 %v658, 6.0
        %v695 = vmin.f32 %v659, 6.0
        %v696 = vmin.f32 %v660, 6.0
        %v697 = vmin.f32 %v661, 6.0
        %v698 = vmin.f32 %v662, 6.0
        %v699 = vmin.f32 %v663, 6.0
        %v700 = vmin.f32 %v664, 6.0
        %v701 = vmin.f32 %v665, 6.0
        %v702 = vmin.f32 %v666, 6.0
        %v703 = vmin.f32 %v667, 6.0
        %v704 = vmin.f32 %v668, 6.0
        %v705 = vmin.f32 %v669, 6.0
        %v706 = vmin.f32 %v670, 6.0
        %v707 = vmin.f32 %v671, 6.0
        %v708 = vmin.f32 %v672, 6.0
        %v709 = vmin.f32 %v673, 6.0
        %v710 = vmin.f32 %v674, 6.0
        %v711 = vmin.f32 %v675, 6.0
        %v712 = vmin.f32 %v676, 6.0
        %v713 = vmin.f32 %v677, 6.0
        %v714 = vmin.f32 %v678, 6.0
        %v715 = vmin.f32 %v679, 6.0
        %v716 = vmin.f32 %v680, 6.0
        %v717 = vmin.f32 %v681, 6.0
        %v718 = vmin.f32 %v682, 6.0
        %v719 = vmin.f32 %v683, 6.0
        %v720 = vmin.f32 %v684, 6.0
        %v721 = vmin.f32 %v685, 6.0
        %v722 = vmin.f32 %v686, 6.0
        %v723 = vmin.f32 %v687, 6.0
        %v724 = vmin.f32 %v688, 6.0
        %v725 = vmin.f32 %v689, 6.0
        %v726 = vmin.f32 %v690, 6.0
        %v727 = vmin.f32 %v691, 6.0
        %v728 = vmin.f32 %v692, 6.0
        %s729 = smul.u32 %s33, 16
        %v730 = vstv %s729
        %v731 = vadd.s32 %v730, 1
        %v732 = vadd.s32 %v730, 2
        %v733 = vadd.s32 %v730, 3
        %v734 = vadd.s32 %v730, 4
        %v735 = vadd.s32 %v730, 5
        %v736 = vadd.s32 %v730, 6
        %v737 = vadd.s32 %v730, 7
        %v738 = vadd.s32 %v730, 8
        %v739 = vadd.s32 %v730, 9
        %v740 = vadd.s32 %v730, 10
        %v741 = vadd.s32 %v730, 11
        %v742 = vadd.s32 %v730, 12
        %v743 = vadd.s32 %v730, 13
        %v744 = vadd.s32 %v730, 14
        %v745 = vadd.s32 %v730, 15
        %v746 = vadd.s32 %v730, 16
        %v747 = vadd.s32 %v730, 17
        %vm748 = vcmp.ge.s32.totalorder %v730, 1
        %vm749 = vcmp.ge.s32.totalorder %v731, 1
        %vm750 = vcmp.ge.s32.totalorder %v732, 1
        %vm751 = vcmp.ge.s32.totalorder %v733, 1
        %vm752 = vcmp.ge.s32.totalorder %v734, 1
        %vm753 = vcmp.ge.s32.totalorder %v735, 1
        %vm754 = vcmp.ge.s32.totalorder %v736, 1
        %vm755 = vcmp.ge.s32.totalorder %v737, 1
        %vm756 = vcmp.ge.s32.totalorder %v738, 1
        %vm757 = vcmp.ge.s32.totalorder %v739, 1
        %vm758 = vcmp.ge.s32.totalorder %v740, 1
        %vm759 = vcmp.ge.s32.totalorder %v741, 1
        %vm760 = vcmp.ge.s32.totalorder %v742, 1
        %vm761 = vcmp.ge.s32.totalorder %v743, 1
        %vm762 = vcmp.ge.s32.totalorder %v744, 1
        %vm763 = vcmp.ge.s32.totalorder %v745, 1
        %vm764 = vcmp.ge.s32.totalorder %v746, 1
        %vm765 = vcmp.ge.s32.totalorder %v747, 1
        %vm766 = vcmp.le.s32.totalorder %v730, 16
        %vm767 = vcmp.le.s32.totalorder %v731, 16
        %vm768 = vcmp.le.s32.totalorder %v732, 16
        %vm769 = vcmp.le.s32.totalorder %v733, 16
        %vm770 = vcmp.le.s32.totalorder %v734, 16
        %vm771 = vcmp.le.s32.totalorder %v735, 16
        %vm772 = vcmp.le.s32.totalorder %v736, 16
        %vm773 = vcmp.le.s32.totalorder %v737, 16
        %vm774 = vcmp.le.s32.totalorder %v738, 16
        %vm775 = vcmp.le.s32.totalorder %v739, 16
        %vm776 = vcmp.le.s32.totalorder %v740, 16
        %vm777 = vcmp.le.s32.totalorder %v741, 16
        %vm778 = vcmp.le.s32.totalorder %v742, 16
        %vm779 = vcmp.le.s32.totalorder %v743, 16
        %vm780 = vcmp.le.s32.totalorder %v744, 16
        %vm781 = vcmp.le.s32.totalorder %v745, 16
        %vm782 = vcmp.le.s32.totalorder %v746, 16
        %vm783 = vcmp.le.s32.totalorder %v747, 16
        %vm784 = vmand %vm748, %vm766
        %vm785 = vmand %vm749, %vm767
        %vm786 = vmand %vm750, %vm768
        %vm787 = vmand %vm751, %vm769
        %vm788 = vmand %vm752, %vm770
        %vm789 = vmand %vm753, %vm771
        %vm790 = vmand %vm754, %vm772
        %vm791 = vmand %vm755, %vm773
        %vm792 = vmand %vm756, %vm774
        %vm793 = vmand %vm757, %vm775
        %vm794 = vmand %vm758, %vm776
        %vm795 = vmand %vm759, %vm777
        %vm796 = vmand %vm760, %vm778
        %vm797 = vmand %vm761, %vm779
        %vm798 = vmand %vm762, %vm780
        %vm799 = vmand %vm763, %vm781
        %vm800 = vmand %vm764, %vm782
        %vm801 = vmand %vm765, %vm783
        %v802 = vsel %vm784, 1, 0
        %v803 = vsel %vm785, 1, 0
        %v804 = vsel %vm786, 1, 0
        %v805 = vsel %vm787, 1, 0
        %v806 = vsel %vm788, 1, 0
        %v807 = vsel %vm789, 1, 0
        %v808 = vsel %vm790, 1, 0
        %v809 = vsel %vm791, 1, 0
        %v810 = vsel %vm792, 1, 0
        %v811 = vsel %vm793, 1, 0
        %v812 = vsel %vm794, 1, 0
        %v813 = vsel %vm795, 1, 0
        %v814 = vsel %vm796, 1, 0
        %v815 = vsel %vm797, 1, 0
        %v816 = vsel %vm798, 1, 0
        %v817 = vsel %vm799, 1, 0
        %v818 = vsel %vm800, 1, 0
        %v819 = vsel %vm801, 1, 0
        %vm820 = vcmp.eq.s32.totalorder %v802, 1
        %vm821 = vcmp.eq.s32.totalorder %v803, 1
        %vm822 = vcmp.eq.s32.totalorder %v804, 1
        %vm823 = vcmp.eq.s32.totalorder %v805, 1
        %vm824 = vcmp.eq.s32.totalorder %v806, 1
        %vm825 = vcmp.eq.s32.totalorder %v807, 1
        %vm826 = vcmp.eq.s32.totalorder %v808, 1
        %vm827 = vcmp.eq.s32.totalorder %v809, 1
        %vm828 = vcmp.eq.s32.totalorder %v810, 1
        %vm829 = vcmp.eq.s32.totalorder %v811, 1
        %vm830 = vcmp.eq.s32.totalorder %v812, 1
        %vm831 = vcmp.eq.s32.totalorder %v813, 1
        %vm832 = vcmp.eq.s32.totalorder %v814, 1
        %vm833 = vcmp.eq.s32.totalorder %v815, 1
        %vm834 = vcmp.eq.s32.totalorder %v816, 1
        %vm835 = vcmp.eq.s32.totalorder %v817, 1
        %vm836 = vcmp.eq.s32.totalorder %v818, 1
        %vm837 = vcmp.eq.s32.totalorder %v819, 1
        %v838 = vsel %vm820, %v693, 0.0
        %v839 = vsel %vm820, %v694, 0.0
        %v840 = vsel %vm821, %v695, 0.0
        %v841 = vsel %vm821, %v696, 0.0
        %v842 = vsel %vm822, %v697, 0.0
        %v843 = vsel %vm822, %v698, 0.0
        %v844 = vsel %vm823, %v699, 0.0
        %v845 = vsel %vm823, %v700, 0.0
        %v846 = vsel %vm824, %v701, 0.0
        %v847 = vsel %vm824, %v702, 0.0
        %v848 = vsel %vm825, %v703, 0.0
        %v849 = vsel %vm825, %v704, 0.0
        %v850 = vsel %vm826, %v705, 0.0
        %v851 = vsel %vm826, %v706, 0.0
        %v852 = vsel %vm827, %v707, 0.0
        %v853 = vsel %vm827, %v708, 0.0
        %v854 = vsel %vm828, %v709, 0.0
        %v855 = vsel %vm828, %v710, 0.0
        %v856 = vsel %vm829, %v711, 0.0
        %v857 = vsel %vm829, %v712, 0.0
        %v858 = vsel %vm830, %v713, 0.0
        %v859 = vsel %vm830, %v714, 0.0
        %v860 = vsel %vm831, %v715, 0.0
        %v861 = vsel %vm831, %v716, 0.0
        %v862 = vsel %vm832, %v717, 0.0
        %v863 = vsel %vm832, %v718, 0.0
        %v864 = vsel %vm833, %v719, 0.0
        %v865 = vsel %vm833, %v720, 0.0
        %v866 = vsel %vm834, %v721, 0.0
        %v867 = vsel %vm834, %v722, 0.0
        %v868 = vsel %vm835, %v723, 0.0
        %v869 = vsel %vm835, %v724, 0.0
        %v870 = vsel %vm836, %v725, 0.0
        %v871 = vsel %vm836, %v726, 0.0
        %v872 = vsel %vm837, %v727, 0.0
        %v873 = vsel %vm837, %v728, 0.0
        %v874 = vld [vmem:[#allocation10] sm:$0x7]
        %v875 = vld [vmem:[#allocation10 + $0x4] sm:$0x7]
        %v876 = vld [vmem:[#allocation10 + $0x8] sm:$0x7]
        %v877 = vlaneseq
        %v878 = vshrl.u32 %v877, 7
        %v879 = vadd.s32 %v878, 8
        %vm880 = vcmp.ge.s32.totalorder %v878, 1
        %vm881 = vcmp.ge.s32.totalorder %v879, 1
        %v882 = vrot.slane %v838, 7
        %v883 = vrot.slane %v840, 7
        %v884 = vrot.slane %v842, 7
        %v885 = vrot.slane %v844, 7
        %v886 = vrot.slane %v846, 7
        %v887 = vrot.slane %v848, 7
        %v888 = vrot.slane %v850, 7
        %v889 = vrot.slane %v852, 7
        %v890 = vrot.slane %v854, 7
        %v891 = vrot.slane %v856, 7
        %v892 = vrot.slane %v858, 7
        %v893 = vrot.slane %v860, 7
        %v894 = vrot.slane %v862, 7
        %v895 = vrot.slane %v864, 7
        %v896 = vrot.slane %v866, 7
        %v897 = vrot.slane %v868, 7
        %v898 = vrot.slane %v870, 7
        %v899 = vrot.slane %v872, 7
        %v900 = vrot.slane %v839, 7
        %v901 = vrot.slane %v841, 7
        %v902 = vrot.slane %v843, 7
        %v903 = vrot.slane %v845, 7
        %v904 = vrot.slane %v847, 7
        %v905 = vrot.slane %v849, 7
        %v906 = vrot.slane %v851, 7
        %v907 = vrot.slane %v853, 7
        %v908 = vrot.slane %v855, 7
        %v909 = vrot.slane %v857, 7
        %v910 = vrot.slane %v859, 7
        %v911 = vrot.slane %v861, 7
        %v912 = vrot.slane %v863, 7
        %v913 = vrot.slane %v865, 7
        %v914 = vrot.slane %v867, 7
        %v915 = vrot.slane %v869, 7
        %v916 = vrot.slane %v871, 7
        %v917 = vrot.slane %v873, 7
        %vm918 = vcmp.lt.s32.totalorder %v878, 1
        %v919 = vsel %vm918, %v882, %v900
        %v920 = vsel %vm918, %v883, %v901
        %v921 = vsel %vm918, %v884, %v902
        %v922 = vsel %vm918, %v885, %v903
        %v923 = vsel %vm918, %v886, %v904
        %v924 = vsel %vm918, %v887, %v905
        %v925 = vsel %vm918, %v888, %v906
        %v926 = vsel %vm918, %v889, %v907
        %v927 = vsel %vm918, %v890, %v908
        %v928 = vsel %vm918, %v891, %v909
        %v929 = vsel %vm918, %v892, %v910
        %v930 = vsel %vm918, %v893, %v911
        %v931 = vsel %vm918, %v894, %v912
        %v932 = vsel %vm918, %v895, %v913
        %v933 = vsel %vm918, %v896, %v914
        %v934 = vsel %vm918, %v897, %v915
        %v935 = vsel %vm918, %v898, %v916
        %v936 = vsel %vm918, %v899, %v917
        %v937 = vsel %vm918, %v900, %v882
        %v938 = vsel %vm918, %v901, %v883
        %v939 = vsel %vm918, %v902, %v884
        %v940 = vsel %vm918, %v903, %v885
        %v941 = vsel %vm918, %v904, %v886
        %v942 = vsel %vm918, %v905, %v887
        %v943 = vsel %vm918, %v906, %v888
        %v944 = vsel %vm918, %v907, %v889
        %v945 = vsel %vm918, %v908, %v890
        %v946 = vsel %vm918, %v909, %v891
        %v947 = vsel %vm918, %v910, %v892
        %v948 = vsel %vm918, %v911, %v893
        %v949 = vsel %vm918, %v912, %v894
        %v950 = vsel %vm918, %v913, %v895
        %v951 = vsel %vm918, %v914, %v896
        %v952 = vsel %vm918, %v915, %v897
        %v953 = vsel %vm918, %v916, %v898
        %v954 = vsel %vm918, %v917, %v899
        %v955 = vsel %vm880, 1, 0
        %v956 = vsel %vm881, 1, 0
        %vm957 = vcmp.eq.s32.totalorder %v955, 1
        %vm958 = vcmp.eq.s32.totalorder %v956, 1
        %v959 = vsel %vm957, %v937, 0.0
        %v960 = vsel %vm958, %v919, 0.0
        %v961 = vsel %vm957, %v938, 0.0
        %v962 = vsel %vm958, %v920, 0.0
        %v963 = vsel %vm957, %v939, 0.0
        %v964 = vsel %vm958, %v921, 0.0
        %v965 = vsel %vm957, %v940, 0.0
        %v966 = vsel %vm958, %v922, 0.0
        %v967 = vsel %vm957, %v941, 0.0
        %v968 = vsel %vm958, %v923, 0.0
        %v969 = vsel %vm957, %v942, 0.0
        %v970 = vsel %vm958, %v924, 0.0
        %v971 = vsel %vm957, %v943, 0.0
        %v972 = vsel %vm958, %v925, 0.0
        %v973 = vsel %vm957, %v944, 0.0
        %v974 = vsel %vm958, %v926, 0.0
        %v975 = vsel %vm957, %v945, 0.0
        %v976 = vsel %vm958, %v927, 0.0
        %v977 = vsel %vm957, %v946, 0.0
        %v978 = vsel %vm958, %v928, 0.0
        %v979 = vsel %vm957, %v947, 0.0
        %v980 = vsel %vm958, %v929, 0.0
        %v981 = vsel %vm957, %v948, 0.0
        %v982 = vsel %vm958, %v930, 0.0
        %v983 = vsel %vm957, %v949, 0.0
        %v984 = vsel %vm958, %v931, 0.0
        %v985 = vsel %vm957, %v950, 0.0
        %v986 = vsel %vm958, %v932, 0.0
        %v987 = vsel %vm957, %v951, 0.0
        %v988 = vsel %vm958, %v933, 0.0
        %v989 = vsel %vm957, %v952, 0.0
        %v990 = vsel %vm958, %v934, 0.0
        %v991 = vsel %vm957, %v953, 0.0
        %v992 = vsel %vm958, %v935, 0.0
        %v993 = vsel %vm957, %v954, 0.0
        %v994 = vsel %vm958, %v936, 0.0
        %vm995 = vcmp.le.s32.totalorder %v878, 14
        %vm996 = vcmp.le.s32.totalorder %v879, 14
        %v997 = vrot.slane %v838, 1
        %v998 = vrot.slane %v840, 1
        %v999 = vrot.slane %v842, 1
        %v1000 = vrot.slane %v844, 1
        %v1001 = vrot.slane %v846, 1
        %v1002 = vrot.slane %v848, 1
        %v1003 = vrot.slane %v850, 1
        %v1004 = vrot.slane %v852, 1
        %v1005 = vrot.slane %v854, 1
        %v1006 = vrot.slane %v856, 1
        %v1007 = vrot.slane %v858, 1
        %v1008 = vrot.slane %v860, 1
        %v1009 = vrot.slane %v862, 1
        %v1010 = vrot.slane %v864, 1
        %v1011 = vrot.slane %v866, 1
        %v1012 = vrot.slane %v868, 1
        %v1013 = vrot.slane %v870, 1
        %v1014 = vrot.slane %v872, 1
        %v1015 = vrot.slane %v839, 1
        %v1016 = vrot.slane %v841, 1
        %v1017 = vrot.slane %v843, 1
        %v1018 = vrot.slane %v845, 1
        %v1019 = vrot.slane %v847, 1
        %v1020 = vrot.slane %v849, 1
        %v1021 = vrot.slane %v851, 1
        %v1022 = vrot.slane %v853, 1
        %v1023 = vrot.slane %v855, 1
        %v1024 = vrot.slane %v857, 1
        %v1025 = vrot.slane %v859, 1
        %v1026 = vrot.slane %v861, 1
        %v1027 = vrot.slane %v863, 1
        %v1028 = vrot.slane %v865, 1
        %v1029 = vrot.slane %v867, 1
        %v1030 = vrot.slane %v869, 1
        %v1031 = vrot.slane %v871, 1
        %v1032 = vrot.slane %v873, 1
        %vm1033 = vcmp.lt.s32.totalorder %v878, 7
        %v1034 = vsel %vm1033, %v997, %v1015
        %v1035 = vsel %vm1033, %v998, %v1016
        %v1036 = vsel %vm1033, %v999, %v1017
        %v1037 = vsel %vm1033, %v1000, %v1018
        %v1038 = vsel %vm1033, %v1001, %v1019
        %v1039 = vsel %vm1033, %v1002, %v1020
        %v1040 = vsel %vm1033, %v1003, %v1021
        %v1041 = vsel %vm1033, %v1004, %v1022
        %v1042 = vsel %vm1033, %v1005, %v1023
        %v1043 = vsel %vm1033, %v1006, %v1024
        %v1044 = vsel %vm1033, %v1007, %v1025
        %v1045 = vsel %vm1033, %v1008, %v1026
        %v1046 = vsel %vm1033, %v1009, %v1027
        %v1047 = vsel %vm1033, %v1010, %v1028
        %v1048 = vsel %vm1033, %v1011, %v1029
        %v1049 = vsel %vm1033, %v1012, %v1030
        %v1050 = vsel %vm1033, %v1013, %v1031
        %v1051 = vsel %vm1033, %v1014, %v1032
        %v1052 = vsel %vm1033, %v1015, %v997
        %v1053 = vsel %vm1033, %v1016, %v998
        %v1054 = vsel %vm1033, %v1017, %v999
        %v1055 = vsel %vm1033, %v1018, %v1000
        %v1056 = vsel %vm1033, %v1019, %v1001
        %v1057 = vsel %vm1033, %v1020, %v1002
        %v1058 = vsel %vm1033, %v1021, %v1003
        %v1059 = vsel %vm1033, %v1022, %v1004
        %v1060 = vsel %vm1033, %v1023, %v1005
        %v1061 = vsel %vm1033, %v1024, %v1006
        %v1062 = vsel %vm1033, %v1025, %v1007
        %v1063 = vsel %vm1033, %v1026, %v1008
        %v1064 = vsel %vm1033, %v1027, %v1009
        %v1065 = vsel %vm1033, %v1028, %v1010
        %v1066 = vsel %vm1033, %v1029, %v1011
        %v1067 = vsel %vm1033, %v1030, %v1012
        %v1068 = vsel %vm1033, %v1031, %v1013
        %v1069 = vsel %vm1033, %v1032, %v1014
        %v1070 = vsel %vm995, 1, 0
        %v1071 = vsel %vm996, 1, 0
        %vm1072 = vcmp.eq.s32.totalorder %v1070, 1
        %vm1073 = vcmp.eq.s32.totalorder %v1071, 1
        %v1074 = vsel %vm1072, %v1034, 0.0
        %v1075 = vsel %vm1073, %v1052, 0.0
        %v1076 = vsel %vm1072, %v1035, 0.0
        %v1077 = vsel %vm1073, %v1053, 0.0
        %v1078 = vsel %vm1072, %v1036, 0.0
        %v1079 = vsel %vm1073, %v1054, 0.0
        %v1080 = vsel %vm1072, %v1037, 0.0
        %v1081 = vsel %vm1073, %v1055, 0.0
        %v1082 = vsel %vm1072, %v1038, 0.0
        %v1083 = vsel %vm1073, %v1056, 0.0
        %v1084 = vsel %vm1072, %v1039, 0.0
        %v1085 = vsel %vm1073, %v1057, 0.0
        %v1086 = vsel %vm1072, %v1040, 0.0
        %v1087 = vsel %vm1073, %v1058, 0.0
        %v1088 = vsel %vm1072, %v1041, 0.0
        %v1089 = vsel %vm1073, %v1059, 0.0
        %v1090 = vsel %vm1072, %v1042, 0.0
        %v1091 = vsel %vm1073, %v1060, 0.0
        %v1092 = vsel %vm1072, %v1043, 0.0
        %v1093 = vsel %vm1073, %v1061, 0.0
        %v1094 = vsel %vm1072, %v1044, 0.0
        %v1095 = vsel %vm1073, %v1062, 0.0
        %v1096 = vsel %vm1072, %v1045, 0.0
        %v1097 = vsel %vm1073, %v1063, 0.0
        %v1098 = vsel %vm1072, %v1046, 0.0
        %v1099 = vsel %vm1073, %v1064, 0.0
        %v1100 = vsel %vm1072, %v1047, 0.0
        %v1101 = vsel %vm1073, %v1065, 0.0
        %v1102 = vsel %vm1072, %v1048, 0.0
        %v1103 = vsel %vm1073, %v1066, 0.0
        %v1104 = vsel %vm1072, %v1049, 0.0
        %v1105 = vsel %vm1073, %v1067, 0.0
        %v1106 = vsel %vm1072, %v1050, 0.0
        %v1107 = vsel %vm1073, %v1068, 0.0
        %v1108 = vsel %vm1072, %v1051, 0.0
        %v1109 = vsel %vm1073, %v1069, 0.0
        %v1110 = vperm.slane %v874, 0
        %v1111 = vmul.f32 %v959, %v1110
        %v1112 = vmul.f32 %v960, %v1110
        %v1113 = vmul.f32 %v961, %v1110
        %v1114 = vmul.f32 %v962, %v1110
        %v1115 = vmul.f32 %v963, %v1110
        %v1116 = vmul.f32 %v964, %v1110
        %v1117 = vmul.f32 %v965, %v1110
        %v1118 = vmul.f32 %v966, %v1110
        %v1119 = vmul.f32 %v967, %v1110
        %v1120 = vmul.f32 %v968, %v1110
        %v1121 = vmul.f32 %v969, %v1110
        %v1122 = vmul.f32 %v970, %v1110
        %v1123 = vmul.f32 %v971, %v1110
        %v1124 = vmul.f32 %v972, %v1110
        %v1125 = vmul.f32 %v973, %v1110
        %v1126 = vmul.f32 %v974, %v1110
        %v1127 = vmul.f32 %v975, %v1110
        %v1128 = vmul.f32 %v976, %v1110
        %v1129 = vmul.f32 %v977, %v1110
        %v1130 = vmul.f32 %v978, %v1110
        %v1131 = vmul.f32 %v979, %v1110
        %v1132 = vmul.f32 %v980, %v1110
        %v1133 = vmul.f32 %v981, %v1110
        %v1134 = vmul.f32 %v982, %v1110
        %v1135 = vmul.f32 %v983, %v1110
        %v1136 = vmul.f32 %v984, %v1110
        %v1137 = vmul.f32 %v985, %v1110
        %v1138 = vmul.f32 %v986, %v1110
        %v1139 = vmul.f32 %v987, %v1110
        %v1140 = vmul.f32 %v988, %v1110
        %v1141 = vmul.f32 %v989, %v1110
        %v1142 = vmul.f32 %v990, %v1110
        %v1143 = vperm.slane %v874, 1
        %v1144 = vmul.f32 %v838, %v1143
        %v1145 = vmul.f32 %v839, %v1143
        %v1146 = vmul.f32 %v840, %v1143
        %v1147 = vmul.f32 %v841, %v1143
        %v1148 = vmul.f32 %v842, %v1143
        %v1149 = vmul.f32 %v843, %v1143
        %v1150 = vmul.f32 %v844, %v1143
        %v1151 = vmul.f32 %v845, %v1143
        %v1152 = vmul.f32 %v846, %v1143
        %v1153 = vmul.f32 %v847, %v1143
        %v1154 = vmul.f32 %v848, %v1143
        %v1155 = vmul.f32 %v849, %v1143
        %v1156 = vmul.f32 %v850, %v1143
        %v1157 = vmul.f32 %v851, %v1143
        %v1158 = vmul.f32 %v852, %v1143
        %v1159 = vmul.f32 %v853, %v1143
        %v1160 = vmul.f32 %v854, %v1143
        %v1161 = vmul.f32 %v855, %v1143
        %v1162 = vmul.f32 %v856, %v1143
        %v1163 = vmul.f32 %v857, %v1143
        %v1164 = vmul.f32 %v858, %v1143
        %v1165 = vmul.f32 %v859, %v1143
        %v1166 = vmul.f32 %v860, %v1143
        %v1167 = vmul.f32 %v861, %v1143
        %v1168 = vmul.f32 %v862, %v1143
        %v1169 = vmul.f32 %v863, %v1143
        %v1170 = vmul.f32 %v864, %v1143
        %v1171 = vmul.f32 %v865, %v1143
        %v1172 = vmul.f32 %v866, %v1143
        %v1173 = vmul.f32 %v867, %v1143
        %v1174 = vmul.f32 %v868, %v1143
        %v1175 = vmul.f32 %v869, %v1143
        %v1176 = vadd.f32 %v1111, %v1144
        %v1177 = vadd.f32 %v1112, %v1145
        %v1178 = vadd.f32 %v1113, %v1146
        %v1179 = vadd.f32 %v1114, %v1147
        %v1180 = vadd.f32 %v1115, %v1148
        %v1181 = vadd.f32 %v1116, %v1149
        %v1182 = vadd.f32 %v1117, %v1150
        %v1183 = vadd.f32 %v1118, %v1151
        %v1184 = vadd.f32 %v1119, %v1152
        %v1185 = vadd.f32 %v1120, %v1153
        %v1186 = vadd.f32 %v1121, %v1154
        %v1187 = vadd.f32 %v1122, %v1155
        %v1188 = vadd.f32 %v1123, %v1156
        %v1189 = vadd.f32 %v1124, %v1157
        %v1190 = vadd.f32 %v1125, %v1158
        %v1191 = vadd.f32 %v1126, %v1159
        %v1192 = vadd.f32 %v1127, %v1160
        %v1193 = vadd.f32 %v1128, %v1161
        %v1194 = vadd.f32 %v1129, %v1162
        %v1195 = vadd.f32 %v1130, %v1163
        %v1196 = vadd.f32 %v1131, %v1164
        %v1197 = vadd.f32 %v1132, %v1165
        %v1198 = vadd.f32 %v1133, %v1166
        %v1199 = vadd.f32 %v1134, %v1167
        %v1200 = vadd.f32 %v1135, %v1168
        %v1201 = vadd.f32 %v1136, %v1169
        %v1202 = vadd.f32 %v1137, %v1170
        %v1203 = vadd.f32 %v1138, %v1171
        %v1204 = vadd.f32 %v1139, %v1172
        %v1205 = vadd.f32 %v1140, %v1173
        %v1206 = vadd.f32 %v1141, %v1174
        %v1207 = vadd.f32 %v1142, %v1175
        %v1208 = vperm.slane %v874, 2
        %v1209 = vmul.f32 %v1074, %v1208
        %v1210 = vmul.f32 %v1075, %v1208
        %v1211 = vmul.f32 %v1076, %v1208
        %v1212 = vmul.f32 %v1077, %v1208
        %v1213 = vmul.f32 %v1078, %v1208
        %v1214 = vmul.f32 %v1079, %v1208
        %v1215 = vmul.f32 %v1080, %v1208
        %v1216 = vmul.f32 %v1081, %v1208
        %v1217 = vmul.f32 %v1082, %v1208
        %v1218 = vmul.f32 %v1083, %v1208
        %v1219 = vmul.f32 %v1084, %v1208
        %v1220 = vmul.f32 %v1085, %v1208
        %v1221 = vmul.f32 %v1086, %v1208
        %v1222 = vmul.f32 %v1087, %v1208
        %v1223 = vmul.f32 %v1088, %v1208
        %v1224 = vmul.f32 %v1089, %v1208
        %v1225 = vmul.f32 %v1090, %v1208
        %v1226 = vmul.f32 %v1091, %v1208
        %v1227 = vmul.f32 %v1092, %v1208
        %v1228 = vmul.f32 %v1093, %v1208
        %v1229 = vmul.f32 %v1094, %v1208
        %v1230 = vmul.f32 %v1095, %v1208
        %v1231 = vmul.f32 %v1096, %v1208
        %v1232 = vmul.f32 %v1097, %v1208
        %v1233 = vmul.f32 %v1098, %v1208
        %v1234 = vmul.f32 %v1099, %v1208
        %v1235 = vmul.f32 %v1100, %v1208
        %v1236 = vmul.f32 %v1101, %v1208
        %v1237 = vmul.f32 %v1102, %v1208
        %v1238 = vmul.f32 %v1103, %v1208
        %v1239 = vmul.f32 %v1104, %v1208
        %v1240 = vmul.f32 %v1105, %v1208
        %v1241 = vadd.f32 %v1176, %v1209
        %v1242 = vadd.f32 %v1177, %v1210
        %v1243 = vadd.f32 %v1178, %v1211
        %v1244 = vadd.f32 %v1179, %v1212
        %v1245 = vadd.f32 %v1180, %v1213
        %v1246 = vadd.f32 %v1181, %v1214
        %v1247 = vadd.f32 %v1182, %v1215
        %v1248 = vadd.f32 %v1183, %v1216
        %v1249 = vadd.f32 %v1184, %v1217
        %v1250 = vadd.f32 %v1185, %v1218
        %v1251 = vadd.f32 %v1186, %v1219
        %v1252 = vadd.f32 %v1187, %v1220
        %v1253 = vadd.f32 %v1188, %v1221
        %v1254 = vadd.f32 %v1189, %v1222
        %v1255 = vadd.f32 %v1190, %v1223
        %v1256 = vadd.f32 %v1191, %v1224
        %v1257 = vadd.f32 %v1192, %v1225
        %v1258 = vadd.f32 %v1193, %v1226
        %v1259 = vadd.f32 %v1194, %v1227
        %v1260 = vadd.f32 %v1195, %v1228
        %v1261 = vadd.f32 %v1196, %v1229
        %v1262 = vadd.f32 %v1197, %v1230
        %v1263 = vadd.f32 %v1198, %v1231
        %v1264 = vadd.f32 %v1199, %v1232
        %v1265 = vadd.f32 %v1200, %v1233
        %v1266 = vadd.f32 %v1201, %v1234
        %v1267 = vadd.f32 %v1202, %v1235
        %v1268 = vadd.f32 %v1203, %v1236
        %v1269 = vadd.f32 %v1204, %v1237
        %v1270 = vadd.f32 %v1205, %v1238
        %v1271 = vadd.f32 %v1206, %v1239
        %v1272 = vadd.f32 %v1207, %v1240
        %v1273 = vperm.slane %v875, 0
        %v1274 = vmul.f32 %v961, %v1273
        %v1275 = vmul.f32 %v962, %v1273
        %v1276 = vmul.f32 %v963, %v1273
        %v1277 = vmul.f32 %v964, %v1273
        %v1278 = vmul.f32 %v965, %v1273
        %v1279 = vmul.f32 %v966, %v1273
        %v1280 = vmul.f32 %v967, %v1273
        %v1281 = vmul.f32 %v968, %v1273
        %v1282 = vmul.f32 %v969, %v1273
        %v1283 = vmul.f32 %v970, %v1273
        %v1284 = vmul.f32 %v971, %v1273
        %v1285 = vmul.f32 %v972, %v1273
        %v1286 = vmul.f32 %v973, %v1273
        %v1287 = vmul.f32 %v974, %v1273
        %v1288 = vmul.f32 %v975, %v1273
        %v1289 = vmul.f32 %v976, %v1273
        %v1290 = vmul.f32 %v977, %v1273
        %v1291 = vmul.f32 %v978, %v1273
        %v1292 = vmul.f32 %v979, %v1273
        %v1293 = vmul.f32 %v980, %v1273
        %v1294 = vmul.f32 %v981, %v1273
        %v1295 = vmul.f32 %v982, %v1273
        %v1296 = vmul.f32 %v983, %v1273
        %v1297 = vmul.f32 %v984, %v1273
        %v1298 = vmul.f32 %v985, %v1273
        %v1299 = vmul.f32 %v986, %v1273
        %v1300 = vmul.f32 %v987, %v1273
        %v1301 = vmul.f32 %v988, %v1273
        %v1302 = vmul.f32 %v989, %v1273
        %v1303 = vmul.f32 %v990, %v1273
        %v1304 = vmul.f32 %v991, %v1273
        %v1305 = vmul.f32 %v992, %v1273
        %v1306 = vadd.f32 %v1241, %v1274
        %v1307 = vadd.f32 %v1242, %v1275
        %v1308 = vadd.f32 %v1243, %v1276
        %v1309 = vadd.f32 %v1244, %v1277
        %v1310 = vadd.f32 %v1245, %v1278
        %v1311 = vadd.f32 %v1246, %v1279
        %v1312 = vadd.f32 %v1247, %v1280
        %v1313 = vadd.f32 %v1248, %v1281
        %v1314 = vadd.f32 %v1249, %v1282
        %v1315 = vadd.f32 %v1250, %v1283
        %v1316 = vadd.f32 %v1251, %v1284
        %v1317 = vadd.f32 %v1252, %v1285
        %v1318 = vadd.f32 %v1253, %v1286
        %v1319 = vadd.f32 %v1254, %v1287
        %v1320 = vadd.f32 %v1255, %v1288
        %v1321 = vadd.f32 %v1256, %v1289
        %v1322 = vadd.f32 %v1257, %v1290
        %v1323 = vadd.f32 %v1258, %v1291
        %v1324 = vadd.f32 %v1259, %v1292
        %v1325 = vadd.f32 %v1260, %v1293
        %v1326 = vadd.f32 %v1261, %v1294
        %v1327 = vadd.f32 %v1262, %v1295
        %v1328 = vadd.f32 %v1263, %v1296
        %v1329 = vadd.f32 %v1264, %v1297
        %v1330 = vadd.f32 %v1265, %v1298
        %v1331 = vadd.f32 %v1266, %v1299
        %v1332 = vadd.f32 %v1267, %v1300
        %v1333 = vadd.f32 %v1268, %v1301
        %v1334 = vadd.f32 %v1269, %v1302
        %v1335 = vadd.f32 %v1270, %v1303
        %v1336 = vadd.f32 %v1271, %v1304
        %v1337 = vadd.f32 %v1272, %v1305
        %v1338 = vperm.slane %v875, 1
        %v1339 = vmul.f32 %v840, %v1338
        %v1340 = vmul.f32 %v841, %v1338
        %v1341 = vmul.f32 %v842, %v1338
        %v1342 = vmul.f32 %v843, %v1338
        %v1343 = vmul.f32 %v844, %v1338
        %v1344 = vmul.f32 %v845, %v1338
        %v1345 = vmul.f32 %v846, %v1338
        %v1346 = vmul.f32 %v847, %v1338
        %v1347 = vmul.f32 %v848, %v1338
        %v1348 = vmul.f32 %v849, %v1338
        %v1349 = vmul.f32 %v850, %v1338
        %v1350 = vmul.f32 %v851, %v1338
        %v1351 = vmul.f32 %v852, %v1338
        %v1352 = vmul.f32 %v853, %v1338
        %v1353 = vmul.f32 %v854, %v1338
        %v1354 = vmul.f32 %v855, %v1338
        %v1355 = vmul.f32 %v856, %v1338
        %v1356 = vmul.f32 %v857, %v1338
        %v1357 = vmul.f32 %v858, %v1338
        %v1358 = vmul.f32 %v859, %v1338
        %v1359 = vmul.f32 %v860, %v1338
        %v1360 = vmul.f32 %v861, %v1338
        %v1361 = vmul.f32 %v862, %v1338
        %v1362 = vmul.f32 %v863, %v1338
        %v1363 = vmul.f32 %v864, %v1338
        %v1364 = vmul.f32 %v865, %v1338
        %v1365 = vmul.f32 %v866, %v1338
        %v1366 = vmul.f32 %v867, %v1338
        %v1367 = vmul.f32 %v868, %v1338
        %v1368 = vmul.f32 %v869, %v1338
        %v1369 = vmul.f32 %v870, %v1338
        %v1370 = vmul.f32 %v871, %v1338
        %v1371 = vadd.f32 %v1306, %v1339
        %v1372 = vadd.f32 %v1307, %v1340
        %v1373 = vadd.f32 %v1308, %v1341
        %v1374 = vadd.f32 %v1309, %v1342
        %v1375 = vadd.f32 %v1310, %v1343
        %v1376 = vadd.f32 %v1311, %v1344
        %v1377 = vadd.f32 %v1312, %v1345
        %v1378 = vadd.f32 %v1313, %v1346
        %v1379 = vadd.f32 %v1314, %v1347
        %v1380 = vadd.f32 %v1315, %v1348
        %v1381 = vadd.f32 %v1316, %v1349
        %v1382 = vadd.f32 %v1317, %v1350
        %v1383 = vadd.f32 %v1318, %v1351
        %v1384 = vadd.f32 %v1319, %v1352
        %v1385 = vadd.f32 %v1320, %v1353
        %v1386 = vadd.f32 %v1321, %v1354
        %v1387 = vadd.f32 %v1322, %v1355
        %v1388 = vadd.f32 %v1323, %v1356
        %v1389 = vadd.f32 %v1324, %v1357
        %v1390 = vadd.f32 %v1325, %v1358
        %v1391 = vadd.f32 %v1326, %v1359
        %v1392 = vadd.f32 %v1327, %v1360
        %v1393 = vadd.f32 %v1328, %v1361
        %v1394 = vadd.f32 %v1329, %v1362
        %v1395 = vadd.f32 %v1330, %v1363
        %v1396 = vadd.f32 %v1331, %v1364
        %v1397 = vadd.f32 %v1332, %v1365
        %v1398 = vadd.f32 %v1333, %v1366
        %v1399 = vadd.f32 %v1334, %v1367
        %v1400 = vadd.f32 %v1335, %v1368
        %v1401 = vadd.f32 %v1336, %v1369
        %v1402 = vadd.f32 %v1337, %v1370
        %v1403 = vperm.slane %v875, 2
        %v1404 = vmul.f32 %v1076, %v1403
        %v1405 = vmul.f32 %v1077, %v1403
        %v1406 = vmul.f32 %v1078, %v1403
        %v1407 = vmul.f32 %v1079, %v1403
        %v1408 = vmul.f32 %v1080, %v1403
        %v1409 = vmul.f32 %v1081, %v1403
        %v1410 = vmul.f32 %v1082, %v1403
        %v1411 = vmul.f32 %v1083, %v1403
        %v1412 = vmul.f32 %v1084, %v1403
        %v1413 = vmul.f32 %v1085, %v1403
        %v1414 = vmul.f32 %v1086, %v1403
        %v1415 = vmul.f32 %v1087, %v1403
        %v1416 = vmul.f32 %v1088, %v1403
        %v1417 = vmul.f32 %v1089, %v1403
        %v1418 = vmul.f32 %v1090, %v1403
        %v1419 = vmul.f32 %v1091, %v1403
        %v1420 = vmul.f32 %v1092, %v1403
        %v1421 = vmul.f32 %v1093, %v1403
        %v1422 = vmul.f32 %v1094, %v1403
        %v1423 = vmul.f32 %v1095, %v1403
        %v1424 = vmul.f32 %v1096, %v1403
        %v1425 = vmul.f32 %v1097, %v1403
        %v1426 = vmul.f32 %v1098, %v1403
        %v1427 = vmul.f32 %v1099, %v1403
        %v1428 = vmul.f32 %v1100, %v1403
        %v1429 = vmul.f32 %v1101, %v1403
        %v1430 = vmul.f32 %v1102, %v1403
        %v1431 = vmul.f32 %v1103, %v1403
        %v1432 = vmul.f32 %v1104, %v1403
        %v1433 = vmul.f32 %v1105, %v1403
        %v1434 = vmul.f32 %v1106, %v1403
        %v1435 = vmul.f32 %v1107, %v1403
        %v1436 = vadd.f32 %v1371, %v1404
        %v1437 = vadd.f32 %v1372, %v1405
        %v1438 = vadd.f32 %v1373, %v1406
        %v1439 = vadd.f32 %v1374, %v1407
        %v1440 = vadd.f32 %v1375, %v1408
        %v1441 = vadd.f32 %v1376, %v1409
        %v1442 = vadd.f32 %v1377, %v1410
        %v1443 = vadd.f32 %v1378, %v1411
        %v1444 = vadd.f32 %v1379, %v1412
        %v1445 = vadd.f32 %v1380, %v1413
        %v1446 = vadd.f32 %v1381, %v1414
        %v1447 = vadd.f32 %v1382, %v1415
        %v1448 = vadd.f32 %v1383, %v1416
        %v1449 = vadd.f32 %v1384, %v1417
        %v1450 = vadd.f32 %v1385, %v1418
        %v1451 = vadd.f32 %v1386, %v1419
        %v1452 = vadd.f32 %v1387, %v1420
        %v1453 = vadd.f32 %v1388, %v1421
        %v1454 = vadd.f32 %v1389, %v1422
        %v1455 = vadd.f32 %v1390, %v1423
        %v1456 = vadd.f32 %v1391, %v1424
        %v1457 = vadd.f32 %v1392, %v1425
        %v1458 = vadd.f32 %v1393, %v1426
        %v1459 = vadd.f32 %v1394, %v1427
        %v1460 = vadd.f32 %v1395, %v1428
        %v1461 = vadd.f32 %v1396, %v1429
        %v1462 = vadd.f32 %v1397, %v1430
        %v1463 = vadd.f32 %v1398, %v1431
        %v1464 = vadd.f32 %v1399, %v1432
        %v1465 = vadd.f32 %v1400, %v1433
        %v1466 = vadd.f32 %v1401, %v1434
        %v1467 = vadd.f32 %v1402, %v1435
        %v1468 = vperm.slane %v876, 0
        %v1469 = vmul.f32 %v963, %v1468
        %v1470 = vmul.f32 %v964, %v1468
        %v1471 = vmul.f32 %v965, %v1468
        %v1472 = vmul.f32 %v966, %v1468
        %v1473 = vmul.f32 %v967, %v1468
        %v1474 = vmul.f32 %v968, %v1468
        %v1475 = vmul.f32 %v969, %v1468
        %v1476 = vmul.f32 %v970, %v1468
        %v1477 = vmul.f32 %v971, %v1468
        %v1478 = vmul.f32 %v972, %v1468
        %v1479 = vmul.f32 %v973, %v1468
        %v1480 = vmul.f32 %v974, %v1468
        %v1481 = vmul.f32 %v975, %v1468
        %v1482 = vmul.f32 %v976, %v1468
        %v1483 = vmul.f32 %v977, %v1468
        %v1484 = vmul.f32 %v978, %v1468
        %v1485 = vmul.f32 %v979, %v1468
        %v1486 = vmul.f32 %v980, %v1468
        %v1487 = vmul.f32 %v981, %v1468
        %v1488 = vmul.f32 %v982, %v1468
        %v1489 = vmul.f32 %v983, %v1468
        %v1490 = vmul.f32 %v984, %v1468
        %v1491 = vmul.f32 %v985, %v1468
        %v1492 = vmul.f32 %v986, %v1468
        %v1493 = vmul.f32 %v987, %v1468
        %v1494 = vmul.f32 %v988, %v1468
        %v1495 = vmul.f32 %v989, %v1468
        %v1496 = vmul.f32 %v990, %v1468
        %v1497 = vmul.f32 %v991, %v1468
        %v1498 = vmul.f32 %v992, %v1468
        %v1499 = vmul.f32 %v993, %v1468
        %v1500 = vmul.f32 %v994, %v1468
        %v1501 = vadd.f32 %v1436, %v1469
        %v1502 = vadd.f32 %v1437, %v1470
        %v1503 = vadd.f32 %v1438, %v1471
        %v1504 = vadd.f32 %v1439, %v1472
        %v1505 = vadd.f32 %v1440, %v1473
        %v1506 = vadd.f32 %v1441, %v1474
        %v1507 = vadd.f32 %v1442, %v1475
        %v1508 = vadd.f32 %v1443, %v1476
        %v1509 = vadd.f32 %v1444, %v1477
        %v1510 = vadd.f32 %v1445, %v1478
        %v1511 = vadd.f32 %v1446, %v1479
        %v1512 = vadd.f32 %v1447, %v1480
        %v1513 = vadd.f32 %v1448, %v1481
        %v1514 = vadd.f32 %v1449, %v1482
        %v1515 = vadd.f32 %v1450, %v1483
        %v1516 = vadd.f32 %v1451, %v1484
        %v1517 = vadd.f32 %v1452, %v1485
        %v1518 = vadd.f32 %v1453, %v1486
        %v1519 = vadd.f32 %v1454, %v1487
        %v1520 = vadd.f32 %v1455, %v1488
        %v1521 = vadd.f32 %v1456, %v1489
        %v1522 = vadd.f32 %v1457, %v1490
        %v1523 = vadd.f32 %v1458, %v1491
        %v1524 = vadd.f32 %v1459, %v1492
        %v1525 = vadd.f32 %v1460, %v1493
        %v1526 = vadd.f32 %v1461, %v1494
        %v1527 = vadd.f32 %v1462, %v1495
        %v1528 = vadd.f32 %v1463, %v1496
        %v1529 = vadd.f32 %v1464, %v1497
        %v1530 = vadd.f32 %v1465, %v1498
        %v1531 = vadd.f32 %v1466, %v1499
        %v1532 = vadd.f32 %v1467, %v1500
        %v1533 = vperm.slane %v876, 1
        %v1534 = vmul.f32 %v842, %v1533
        %v1535 = vmul.f32 %v843, %v1533
        %v1536 = vmul.f32 %v844, %v1533
        %v1537 = vmul.f32 %v845, %v1533
        %v1538 = vmul.f32 %v846, %v1533
        %v1539 = vmul.f32 %v847, %v1533
        %v1540 = vmul.f32 %v848, %v1533
        %v1541 = vmul.f32 %v849, %v1533
        %v1542 = vmul.f32 %v850, %v1533
        %v1543 = vmul.f32 %v851, %v1533
        %v1544 = vmul.f32 %v852, %v1533
        %v1545 = vmul.f32 %v853, %v1533
        %v1546 = vmul.f32 %v854, %v1533
        %v1547 = vmul.f32 %v855, %v1533
        %v1548 = vmul.f32 %v856, %v1533
        %v1549 = vmul.f32 %v857, %v1533
        %v1550 = vmul.f32 %v858, %v1533
        %v1551 = vmul.f32 %v859, %v1533
        %v1552 = vmul.f32 %v860, %v1533
        %v1553 = vmul.f32 %v861, %v1533
        %v1554 = vmul.f32 %v862, %v1533
        %v1555 = vmul.f32 %v863, %v1533
        %v1556 = vmul.f32 %v864, %v1533
        %v1557 = vmul.f32 %v865, %v1533
        %v1558 = vmul.f32 %v866, %v1533
        %v1559 = vmul.f32 %v867, %v1533
        %v1560 = vmul.f32 %v868, %v1533
        %v1561 = vmul.f32 %v869, %v1533
        %v1562 = vmul.f32 %v870, %v1533
        %v1563 = vmul.f32 %v871, %v1533
        %v1564 = vmul.f32 %v872, %v1533
        %v1565 = vmul.f32 %v873, %v1533
        %v1566 = vadd.f32 %v1501, %v1534
        %v1567 = vadd.f32 %v1502, %v1535
        %v1568 = vadd.f32 %v1503, %v1536
        %v1569 = vadd.f32 %v1504, %v1537
        %v1570 = vadd.f32 %v1505, %v1538
        %v1571 = vadd.f32 %v1506, %v1539
        %v1572 = vadd.f32 %v1507, %v1540
        %v1573 = vadd.f32 %v1508, %v1541
        %v1574 = vadd.f32 %v1509, %v1542
        %v1575 = vadd.f32 %v1510, %v1543
        %v1576 = vadd.f32 %v1511, %v1544
        %v1577 = vadd.f32 %v1512, %v1545
        %v1578 = vadd.f32 %v1513, %v1546
        %v1579 = vadd.f32 %v1514, %v1547
        %v1580 = vadd.f32 %v1515, %v1548
        %v1581 = vadd.f32 %v1516, %v1549
        %v1582 = vadd.f32 %v1517, %v1550
        %v1583 = vadd.f32 %v1518, %v1551
        %v1584 = vadd.f32 %v1519, %v1552
        %v1585 = vadd.f32 %v1520, %v1553
        %v1586 = vadd.f32 %v1521, %v1554
        %v1587 = vadd.f32 %v1522, %v1555
        %v1588 = vadd.f32 %v1523, %v1556
        %v1589 = vadd.f32 %v1524, %v1557
        %v1590 = vadd.f32 %v1525, %v1558
        %v1591 = vadd.f32 %v1526, %v1559
        %v1592 = vadd.f32 %v1527, %v1560
        %v1593 = vadd.f32 %v1528, %v1561
        %v1594 = vadd.f32 %v1529, %v1562
        %v1595 = vadd.f32 %v1530, %v1563
        %v1596 = vadd.f32 %v1531, %v1564
        %v1597 = vadd.f32 %v1532, %v1565
        %v1598 = vperm.slane %v876, 2
        %v1599 = vmul.f32 %v1078, %v1598
        %v1600 = vmul.f32 %v1079, %v1598
        %v1601 = vmul.f32 %v1080, %v1598
        %v1602 = vmul.f32 %v1081, %v1598
        %v1603 = vmul.f32 %v1082, %v1598
        %v1604 = vmul.f32 %v1083, %v1598
        %v1605 = vmul.f32 %v1084, %v1598
        %v1606 = vmul.f32 %v1085, %v1598
        %v1607 = vmul.f32 %v1086, %v1598
        %v1608 = vmul.f32 %v1087, %v1598
        %v1609 = vmul.f32 %v1088, %v1598
        %v1610 = vmul.f32 %v1089, %v1598
        %v1611 = vmul.f32 %v1090, %v1598
        %v1612 = vmul.f32 %v1091, %v1598
        %v1613 = vmul.f32 %v1092, %v1598
        %v1614 = vmul.f32 %v1093, %v1598
        %v1615 = vmul.f32 %v1094, %v1598
        %v1616 = vmul.f32 %v1095, %v1598
        %v1617 = vmul.f32 %v1096, %v1598
        %v1618 = vmul.f32 %v1097, %v1598
        %v1619 = vmul.f32 %v1098, %v1598
        %v1620 = vmul.f32 %v1099, %v1598
        %v1621 = vmul.f32 %v1100, %v1598
        %v1622 = vmul.f32 %v1101, %v1598
        %v1623 = vmul.f32 %v1102, %v1598
        %v1624 = vmul.f32 %v1103, %v1598
        %v1625 = vmul.f32 %v1104, %v1598
        %v1626 = vmul.f32 %v1105, %v1598
        %v1627 = vmul.f32 %v1106, %v1598
        %v1628 = vmul.f32 %v1107, %v1598
        %v1629 = vmul.f32 %v1108, %v1598
        %v1630 = vmul.f32 %v1109, %v1598
        %v1631 = vadd.f32 %v1566, %v1599
        %v1632 = vadd.f32 %v1567, %v1600
        %v1633 = vadd.f32 %v1568, %v1601
        %v1634 = vadd.f32 %v1569, %v1602
        %v1635 = vadd.f32 %v1570, %v1603
        %v1636 = vadd.f32 %v1571, %v1604
        %v1637 = vadd.f32 %v1572, %v1605
        %v1638 = vadd.f32 %v1573, %v1606
        %v1639 = vadd.f32 %v1574, %v1607
        %v1640 = vadd.f32 %v1575, %v1608
        %v1641 = vadd.f32 %v1576, %v1609
        %v1642 = vadd.f32 %v1577, %v1610
        %v1643 = vadd.f32 %v1578, %v1611
        %v1644 = vadd.f32 %v1579, %v1612
        %v1645 = vadd.f32 %v1580, %v1613
        %v1646 = vadd.f32 %v1581, %v1614
        %v1647 = vadd.f32 %v1582, %v1615
        %v1648 = vadd.f32 %v1583, %v1616
        %v1649 = vadd.f32 %v1584, %v1617
        %v1650 = vadd.f32 %v1585, %v1618
        %v1651 = vadd.f32 %v1586, %v1619
        %v1652 = vadd.f32 %v1587, %v1620
        %v1653 = vadd.f32 %v1588, %v1621
        %v1654 = vadd.f32 %v1589, %v1622
        %v1655 = vadd.f32 %v1590, %v1623
        %v1656 = vadd.f32 %v1591, %v1624
        %v1657 = vadd.f32 %v1592, %v1625
        %v1658 = vadd.f32 %v1593, %v1626
        %v1659 = vadd.f32 %v1594, %v1627
        %v1660 = vadd.f32 %v1595, %v1628
        %v1661 = vadd.f32 %v1596, %v1629
        %v1662 = vadd.f32 %v1597, %v1630
        %v1663 = vld [vmem:[%s6] sm:$0x1]
        %v1665 = vperm.slane %v1663, 0
        %v1667 = vadd.f32 %v1631, %v1665
        %v1668 = vadd.f32 %v1632, %v1665
        %v1669 = vadd.f32 %v1633, %v1665
        %v1670 = vadd.f32 %v1634, %v1665
        %v1671 = vadd.f32 %v1635, %v1665
        %v1672 = vadd.f32 %v1636, %v1665
        %v1673 = vadd.f32 %v1637, %v1665
        %v1674 = vadd.f32 %v1638, %v1665
        %v1675 = vadd.f32 %v1639, %v1665
        %v1676 = vadd.f32 %v1640, %v1665
        %v1677 = vadd.f32 %v1641, %v1665
        %v1678 = vadd.f32 %v1642, %v1665
        %v1679 = vadd.f32 %v1643, %v1665
        %v1680 = vadd.f32 %v1644, %v1665
        %v1681 = vadd.f32 %v1645, %v1665
        %v1682 = vadd.f32 %v1646, %v1665
        %v1683 = vadd.f32 %v1647, %v1665
        %v1684 = vadd.f32 %v1648, %v1665
        %v1685 = vadd.f32 %v1649, %v1665
        %v1686 = vadd.f32 %v1650, %v1665
        %v1687 = vadd.f32 %v1651, %v1665
        %v1688 = vadd.f32 %v1652, %v1665
        %v1689 = vadd.f32 %v1653, %v1665
        %v1690 = vadd.f32 %v1654, %v1665
        %v1691 = vadd.f32 %v1655, %v1665
        %v1692 = vadd.f32 %v1656, %v1665
        %v1693 = vadd.f32 %v1657, %v1665
        %v1694 = vadd.f32 %v1658, %v1665
        %v1695 = vadd.f32 %v1659, %v1665
        %v1696 = vadd.f32 %v1660, %v1665
        %v1697 = vadd.f32 %v1661, %v1665
        %v1698 = vadd.f32 %v1662, %v1665
        %v1699 = vmax.f32 %v1667, 0.0
        %v1700 = vmax.f32 %v1668, 0.0
        %v1701 = vmax.f32 %v1669, 0.0
        %v1702 = vmax.f32 %v1670, 0.0
        %v1703 = vmax.f32 %v1671, 0.0
        %v1704 = vmax.f32 %v1672, 0.0
        %v1705 = vmax.f32 %v1673, 0.0
        %v1706 = vmax.f32 %v1674, 0.0
        %v1707 = vmax.f32 %v1675, 0.0
        %v1708 = vmax.f32 %v1676, 0.0
        %v1709 = vmax.f32 %v1677, 0.0
        %v1710 = vmax.f32 %v1678, 0.0
        %v1711 = vmax.f32 %v1679, 0.0
        %v1712 = vmax.f32 %v1680, 0.0
        %v1713 = vmax.f32 %v1681, 0.0
        %v1714 = vmax.f32 %v1682, 0.0
        %v1715 = vmax.f32 %v1683, 0.0
        %v1716 = vmax.f32 %v1684, 0.0
        %v1717 = vmax.f32 %v1685, 0.0
        %v1718 = vmax.f32 %v1686, 0.0
        %v1719 = vmax.f32 %v1687, 0.0
        %v1720 = vmax.f32 %v1688, 0.0
        %v1721 = vmax.f32 %v1689, 0.0
        %v1722 = vmax.f32 %v1690, 0.0
        %v1723 = vmax.f32 %v1691, 0.0
        %v1724 = vmax.f32 %v1692, 0.0
        %v1725 = vmax.f32 %v1693, 0.0
        %v1726 = vmax.f32 %v1694, 0.0
        %v1727 = vmax.f32 %v1695, 0.0
        %v1728 = vmax.f32 %v1696, 0.0
        %v1729 = vmax.f32 %v1697, 0.0
        %v1730 = vmax.f32 %v1698, 0.0
        %v1731 = vmin.f32 %v1699, 6.0
        %v1732 = vmin.f32 %v1700, 6.0
        %v1733 = vmin.f32 %v1701, 6.0
        %v1734 = vmin.f32 %v1702, 6.0
        %v1735 = vmin.f32 %v1703, 6.0
        %v1736 = vmin.f32 %v1704, 6.0
        %v1737 = vmin.f32 %v1705, 6.0
        %v1738 = vmin.f32 %v1706, 6.0
        %v1739 = vmin.f32 %v1707, 6.0
        %v1740 = vmin.f32 %v1708, 6.0
        %v1741 = vmin.f32 %v1709, 6.0
        %v1742 = vmin.f32 %v1710, 6.0
        %v1743 = vmin.f32 %v1711, 6.0
        %v1744 = vmin.f32 %v1712, 6.0
        %v1745 = vmin.f32 %v1713, 6.0
        %v1746 = vmin.f32 %v1714, 6.0
        %v1747 = vmin.f32 %v1715, 6.0
        %v1748 = vmin.f32 %v1716, 6.0
        %v1749 = vmin.f32 %v1717, 6.0
        %v1750 = vmin.f32 %v1718, 6.0
        %v1751 = vmin.f32 %v1719, 6.0
        %v1752 = vmin.f32 %v1720, 6.0
        %v1753 = vmin.f32 %v1721, 6.0
        %v1754 = vmin.f32 %v1722, 6.0
        %v1755 = vmin.f32 %v1723, 6.0
        %v1756 = vmin.f32 %v1724, 6.0
        %v1757 = vmin.f32 %v1725, 6.0
        %v1758 = vmin.f32 %v1726, 6.0
        %v1759 = vmin.f32 %v1727, 6.0
        %v1760 = vmin.f32 %v1728, 6.0
        %v1761 = vmin.f32 %v1729, 6.0
        %v1762 = vmin.f32 %v1730, 6.0
        %1763 = vst [vmem:[%s463] sm:$0xff] %v1731
        %1764 = vst [vmem:[%s463 + $0x8] sm:$0xff] %v1732
        %1765 = vst [vmem:[%s463 + $0x10] sm:$0xff] %v1733
        %1766 = vst [vmem:[%s463 + $0x18] sm:$0xff] %v1734
        %1767 = vst [vmem:[%s463 + $0x20] sm:$0xff] %v1735
        %1768 = vst [vmem:[%s463 + $0x28] sm:$0xff] %v1736
        %1769 = vst [vmem:[%s463 + $0x30] sm:$0xff] %v1737
        %1770 = vst [vmem:[%s463 + $0x38] sm:$0xff] %v1738
        %1771 = vst [vmem:[%s463 + $0x40] sm:$0xff] %v1739
        %1772 = vst [vmem:[%s463 + $0x48] sm:$0xff] %v1740
        %1773 = vst [vmem:[%s463 + $0x50] sm:$0xff] %v1741
        %1774 = vst [vmem:[%s463 + $0x58] sm:$0xff] %v1742
        %1775 = vst [vmem:[%s463 + $0x60] sm:$0xff] %v1743
        %1776 = vst [vmem:[%s463 + $0x68] sm:$0xff] %v1744
        %1777 = vst [vmem:[%s463 + $0x70] sm:$0xff] %v1745
        %1778 = vst [vmem:[%s463 + $0x78] sm:$0xff] %v1746
        %1779 = vst [vmem:[%s463 + $0x80] sm:$0xff] %v1747
        %1780 = vst [vmem:[%s463 + $0x88] sm:$0xff] %v1748
        %1781 = vst [vmem:[%s463 + $0x90] sm:$0xff] %v1749
        %1782 = vst [vmem:[%s463 + $0x98] sm:$0xff] %v1750
        %1783 = vst [vmem:[%s463 + $0xa0] sm:$0xff] %v1751
        %1784 = vst [vmem:[%s463 + $0xa8] sm:$0xff] %v1752
        %1785 = vst [vmem:[%s463 + $0xb0] sm:$0xff] %v1753
        %1786 = vst [vmem:[%s463 + $0xb8] sm:$0xff] %v1754
        %1787 = vst [vmem:[%s463 + $0xc0] sm:$0xff] %v1755
        %1788 = vst [vmem:[%s463 + $0xc8] sm:$0xff] %v1756
        %1789 = vst [vmem:[%s463 + $0xd0] sm:$0xff] %v1757
        %1790 = vst [vmem:[%s463 + $0xd8] sm:$0xff] %v1758
        %1791 = vst [vmem:[%s463 + $0xe0] sm:$0xff] %v1759
        %1792 = vst [vmem:[%s463 + $0xe8] sm:$0xff] %v1760
        %1793 = vst [vmem:[%s463 + $0xf0] sm:$0xff] %v1761
        %1794 = vst [vmem:[%s463 + $0xf8] sm:$0xff] %v1762
        %s1795 = sand.u32 %s228, 1
        %s1796 = scalar_lea.sflag [#allocation4], %s1795
        %s1797 = sand.u32 %s228, 1
        %s1798 = smul.addr %s1797, 256
        %s1799 = scalar_lea.vmem [#allocation11], %s1798
        // Predicated region
        $region69: #{tpu_custom_call.1} parent=47 // pred_check
          %p1800 = pneg %p238
        $region70: #{tpu_custom_call.1} parent=47 // pred_check_branch
          %1802 = sbr.rel (%p1800) target = $region72
        $region71: #{tpu_custom_call.1} parent=47 // pred_region
          %s1803 = smul.u32 16, %s33
          %1805 = vsyncadd %s1796, 0
          %s1806 = smul.addr %s1803, 2
          %s1807 = smul.addr %s32, 32
          %s1808 = sadd.s32 %s1806, %s1807
          %s1809 = smul.addr %s1808, 8
          %s1810 = scalar_lea.hbm %s7, %s1809
          %s1811 = sshll.u32 %s1799, 4
          %s1812 = int_to_ptr.vmem [resolvable:$true] %s1811
          %s1813 = sshll.u32 %s1810, 4
          %s1814 = int_to_ptr.hbm [resolvable:$true] %s1813
          %1819 = dma.vmem_to_hbm [thread:$0]  %s1812, 4096, %s1814, %s1796, 128, 128, 8
        $region72: #{tpu_custom_call.1} parent=47 // pred_fallthru
          _
      $region48: #{tpu_custom_call.1} parent=5 // pred_fallthru
        _
      %p1820 = scmp.le.s32.totalorder 2, %s23
      // Predicated region
      $region73: #{tpu_custom_call.1} parent=5 // pred_check
        %p1821 = pneg %p1820
      $region74: #{tpu_custom_call.1} parent=5 // pred_check_branch
        %1823 = sbr.rel (%p1821) target = $region76
      $region75: #{tpu_custom_call.1} parent=5 // pred_region
        %s1824 = ssub.s32 %s23, 2
        // Predicated region
        $region77: #{tpu_custom_call.1} parent=75 // pred_check
          %p1825 = pneg %p244
        $region78: #{tpu_custom_call.1} parent=75 // pred_check_branch
          %1827 = sbr.rel (%p1825) target = $region80
        $region79: #{tpu_custom_call.1} parent=75 // pred_region
          %s1828 = sand.u32 %s229, 1
          %s1829 = scalar_lea.sflag [#allocation4], %s1828
          %s1830 = sand.u32 %s229, 1
          %s1831 = smul.addr %s1830, 256
          %s1832 = scalar_lea.vmem [#allocation11], %s1831
          %1834 = dma.done %s1829, 4096
        $region80: #{tpu_custom_call.1} parent=75 // pred_fallthru
          _
      $region76: #{tpu_custom_call.1} parent=5 // pred_fallthru
        _
    $region6: #{tpu_custom_call.1} parent=1 // loop_footer
      %s27 = sadd.s32 1, %s23
    $region7: #{tpu_custom_call.1} parent=1 // loop_footer_branch
      %22 = sbr.rel target = $region3
    $region8: #{tpu_custom_call.1} parent=1 // loop_exit
      _
    %1835 = vsyncpa [#allocation3], 1
    %s1836 = scalar_lea.sflag [#allocation3], 1
    %1837 = vsyncpa %s1836, 1
    %1838 = vsyncpa [#allocation6], 1
    %s1839 = scalar_lea.sflag [#allocation6], 1
    %1840 = vsyncpa %s1839, 1
    %1841 = vsyncpa [#allocation9], 1
    %1842 = vsyncpa [#allocation4], 1
    %s1843 = scalar_lea.sflag [#allocation4], 1
    %1844 = vsyncpa %s1843, 1

</llo_original>
